<compile_context>
chip_gen: v5e
topology: v5e:2x2
jax: 0.10.0
libtpu: 0.0.40
codegen_flags: <defaults>
</compile_context>

<pallas_src>
import functools

import numpy as np
import jax
import jax.numpy as jnp
from jax.experimental import pallas as pl
from jax.experimental.pallas import tpu as pltpu


def _round_up(x, m):
    return ((x + m - 1) // m) * m


# ----------------------------------------------------------------------------
# Kernel 1: fused linear (+ optional GELU) -- used for all backbone matmuls.
# bf16 operands on the MXU, f32 accumulation, f32 bias/activation.
# ----------------------------------------------------------------------------
def _linear_kernel(x_ref, w_ref, b_ref, o_ref, *, act):
    x = x_ref[...].astype(jnp.bfloat16)      # cast only at the dot (v5e-safe)
    w = w_ref[...]                           # already bf16
    y = jnp.dot(x, w, preferred_element_type=jnp.float32)
    y = y + b_ref[...]
    if act == "gelu":
        # TODO(synk): PyTorch nn.GELU defaults to the exact erf form; the tanh
        # approximation is used here (small per-element mismatch).
        y = jax.nn.gelu(y, approximate=True)
    o_ref[...] = y.astype(o_ref.dtype)


def pallas_linear(x, w, b, act=None, tm_cap=512):
    """y = act(x @ w + b).  Pads M to a multiple of tm and N to a multiple of
    128 (lane-dense stores); padding is sliced off before returning."""
    M, K = x.shape
    Kw, N = w.shape
    assert K == Kw
    Npad = _round_up(N, 128)
    tm = min(tm_cap, _round_up(M, 8))
    Mpad = _round_up(M, tm)

    xp = jnp.pad(x, ((0, Mpad - M), (0, 0))) if Mpad != M else x
    wp = jnp.pad(w, ((0, 0), (0, Npad - N))).astype(jnp.bfloat16)
    bp = jnp.pad(b, (0, Npad - N)).reshape(1, Npad).astype(jnp.float32)

    out = pl.pallas_call(
        functools.partial(_linear_kernel, act=act),
        out_shape=jax.ShapeDtypeStruct((Mpad, Npad), jnp.float32),
        grid=(Mpad // tm,),
        in_specs=[
            pl.BlockSpec((tm, K), lambda i: (i, 0)),
            pl.BlockSpec((K, Npad), lambda i: (0, 0)),
            pl.BlockSpec((1, Npad), lambda i: (0, 0)),
        ],
        out_specs=pl.BlockSpec((tm, Npad), lambda i: (i, 0)),
        compiler_params=pltpu.CompilerParams(dimension_semantics=("parallel",)),
    )(xp, wp, bp)
    return out[:M, :N]


# ----------------------------------------------------------------------------
# Kernel 2: fused 2-D DFT + magnitude/phase + |diff| reduction.
#
# Each grid step processes 2*TB slices (TB for SR, TB for HR) stacked along
# rows as a (2*TB*Wf, C) block:
#   fft2(X) = F_W @ X @ F_C    (F symmetric), split into real/imag parts so
# everything is real 2-D MXU matmuls.  The left (per-slice) DFT is applied via
# the block-diagonal matrix kron(I_{2*TB}, F_W) so the whole step stays 2-D.
# Per-step |Δmag| / |Δphase| are accumulated elementwise into VMEM scratch
# (pure VPU); the cross-lane reduce + store happen once per chunk.
# ----------------------------------------------------------------------------
def _fft_mag_phase_loss_kernel(x_ref, grm_ref, gim_ref, frn_ref, fin_ref,
                               mag_out_ref, ph_out_ref, acc_mag, acc_ph,
                               *, rows):
    j = pl.program_id(1)

    @pl.when(j == 0)
    def _():
        acc_mag[...] = jnp.zeros_like(acc_mag)
        acc_ph[...] = jnp.zeros_like(acc_ph)

    x = x_ref[...]                      # (2R, C): rows [:R]=SR, [R:]=HR
    frn = frn_ref[...]
    fin = fin_ref[...]
    grm = grm_ref[...]
    gim = gim_ref[...]

    # right-side DFT over the channel axis: one big (2R, C) @ (C, C) pair
    tr = jnp.dot(x, frn, preferred_element_type=jnp.float32)
    ti = jnp.dot(x, fin, preferred_element_type=jnp.float32)

    # left-side DFT over the W' axis within each slice (block-diagonal)
    yr = (jnp.dot(grm, tr, preferred_element_type=jnp.float32)
          - jnp.dot(gim, ti, preferred_element_type=jnp.float32))
    yi = (jnp.dot(grm, ti, preferred_element_type=jnp.float32)
          + jnp.dot(gim, tr, preferred_element_type=jnp.float32))

    mag = jnp.sqrt(yr * yr + yi * yi)
    ph = jnp.arctan2(yi, yr)            # torch.angle == atan2(imag, real)

    acc_mag[...] += jnp.abs(mag[:rows, :] - mag[rows:, :])
    acc_ph[...] += jnp.abs(ph[:rows, :] - ph[rows:, :])

    @pl.when(j == pl.num_programs(1) - 1)
    def _():
        mag_out_ref[...] = jnp.broadcast_to(jnp.sum(acc_mag[...]), (1, 1, 1))
        ph_out_ref[...] = jnp.broadcast_to(jnp.sum(acc_ph[...]), (1, 1, 1))


def _choose_split(n_slices, wf, row_cap=512):
    """Split n_slices (=B*H') into num_chunks (parallel, feeds megacore on
    v7x) x steps (arbitrary) x TB slices per step, preferring sublane-aligned
    row blocks (TB*Wf multiple of 8) and the largest TB under a row cap."""
    num_chunks = 2 if (n_slices % 2 == 0 and n_slices >= 2) else 1
    per_chunk = n_slices // num_chunks
    cap = max(1, row_cap // max(wf, 1))
    best = 1
    for tb in range(2, per_chunk + 1):
        if per_chunk % tb or tb > cap:
            continue
        best_aligned = (best * wf) % 8 == 0
        tb_aligned = (tb * wf) % 8 == 0
        if (tb_aligned and not best_aligned) or \
           (tb_aligned == best_aligned and tb > best):
            best = tb
    return num_chunks, per_chunk // best, best


def fft_mag_phase_loss(feat_pair):
    """feat_pair: (2B, H', W', C), first B = SR features, last B = HR features.
    Returns (mean |Δmagnitude|, mean |Δphase|) for this feature layer."""
    twoB, Hf, Wf, C = feat_pair.shape
    B = twoB // 2
    n_slices = B * Hf
    num_chunks, steps, tb = _choose_split(n_slices, Wf)
    R = tb * Wf                       # SR rows per step (HR adds another R)
    nblk = num_chunks * steps

    # Arrange data so each kernel block is the SR slices followed by the HR
    # slices of the same chunk -> no in-kernel concat (layout plumbing only).
    sr3 = feat_pair[:B].reshape(nblk, R, C)
    hr3 = feat_pair[B:].reshape(nblk, R, C)
    both = jnp.concatenate([sr3, hr3], axis=1).reshape(nblk * 2 * R, C)

    def dft_mats(n):
        k = np.arange(n)
        ang = -2.0 * np.pi * np.outer(k, k) / n
        return np.cos(ang).astype(np.float32), np.sin(ang).astype(np.float32)

    fr_w, fi_w = dft_mats(Wf)                       # left DFT (axis -2)
    eye = np.eye(2 * tb, dtype=np.float32)
    grm = jnp.asarray(np.kron(eye, fr_w))           # (2R, 2R) block-diagonal
    gim = jnp.asarray(np.kron(eye, fi_w))
    fr_c, fi_c = dft_mats(C)                        # right DFT (axis -1)
    frn = jnp.asarray(fr_c)
    fin = jnp.asarray(fi_c)

    # NOTE: at real Hiera widths (C=768) the constant DFT matrices should be
    # single-buffered / loaded once to respect v7x's 64 MiB VMEM; at these
    # sizes the default double-buffering is far below the scoped limit.
    mag_part, ph_part = pl.pallas_call(
        functools.partial(_fft_mag_phase_loss_kernel, rows=R),
        out_shape=(jax.ShapeDtypeStruct((num_chunks, 1, 1), jnp.float32),
                   jax.ShapeDtypeStruct((num_chunks, 1, 1), jnp.float32)),
        grid=(num_chunks, steps),
        in_specs=[
            pl.BlockSpec((2 * R, C), lambda c, j: (c * steps + j, 0)),
            pl.BlockSpec((2 * R, 2 * R), lambda c, j: (0, 0)),
            pl.BlockSpec((2 * R, 2 * R), lambda c, j: (0, 0)),
            pl.BlockSpec((C, C), lambda c, j: (0, 0)),
            pl.BlockSpec((C, C), lambda c, j: (0, 0)),
        ],
        out_specs=(pl.BlockSpec((1, 1, 1), lambda c, j: (c, 0, 0)),
                   pl.BlockSpec((1, 1, 1), lambda c, j: (c, 0, 0))),
        scratch_shapes=[pltpu.VMEM((R, C), jnp.float32),
                        pltpu.VMEM((R, C), jnp.float32)],
        compiler_params=pltpu.CompilerParams(
            dimension_semantics=("parallel", "arbitrary")),
    )(both, grm, gim, frn, fin)

    n_elem = jnp.float32(B * Hf * Wf * C)
    return jnp.sum(mag_part) / n_elem, jnp.sum(ph_part) / n_elem


# ----------------------------------------------------------------------------
# Hiera-lite feature extractor (frozen, deterministic).
# TODO(synk): the real pretrained Hiera backbone (windowed-attention blocks +
# ImageNet checkpoint) cannot be reproduced in-script; a deterministic
# hierarchical patch-embed / 2x2-pool / MLP stack with the same intermediate
# interface ([B, H', W', C] per stage) stands in for it.
# ----------------------------------------------------------------------------
def init_hiera_lite_params(key, in_chans=3, patch=4, embed_dim=32,
                           num_stages=2):
    params = []
    keys = jax.random.split(key, 2 * num_stages)
    dim_in = in_chans * patch * patch
    dim_out = embed_dim
    for s in range(num_stages):
        if s > 0:
            dim_in = dim_out * 4      # 2x2 spatial pooling via channel concat
            dim_out = dim_out * 2     # Hiera-style channel doubling per stage
        params.append(dict(
            w=jax.random.normal(keys[2 * s], (dim_in, dim_out), jnp.float32)
              * (1.0 / np.sqrt(dim_in)),
            b=jax.random.normal(keys[2 * s + 1], (dim_out,), jnp.float32)
              * 0.01,
        ))
    return params


def hiera_lite_features(x_nchw, params, patch=4):
    B, Cin, H, W = x_nchw.shape
    p = patch
    # im2col patchify (glue): NCHW -> [B, H/p, W/p, p*p*Cin]
    xp = x_nchw.reshape(B, Cin, H // p, p, W // p, p)
    xp = xp.transpose(0, 2, 4, 3, 5, 1).reshape(B, H // p, W // p,
                                                p * p * Cin)
    feats = []
    cur = xp
    for si, pr in enumerate(params):
        Bc, Hc, Wc, Cc = cur.shape
        if si > 0:
            # stage transition: 2x2 spatial pool by channel concat (glue)
            cur = cur.reshape(Bc, Hc // 2, 2, Wc // 2, 2, Cc)
            cur = cur.transpose(0, 1, 3, 2, 4, 5).reshape(
                Bc, Hc // 2, Wc // 2, 4 * Cc)
            Hc, Wc, Cc = Hc // 2, Wc // 2, 4 * Cc
        flat = cur.reshape(Bc * Hc * Wc, Cc)
        out = pallas_linear(flat, pr["w"], pr["b"], act="gelu")
        cur = out.reshape(Bc, Hc, Wc, pr["w"].shape[1])
        feats.append(cur)
    return feats


# ----------------------------------------------------------------------------
# Full forward: HieraPerceptualLossNoMSE(sr, hr)
# ----------------------------------------------------------------------------
def hiera_perceptual_loss_no_mse(sr_image, hr_image, params, layers=(1,),
                                 alpha=0.5):
    # One fused backbone pass over [SR; HR] (shared frozen weights).
    both_imgs = jnp.concatenate([sr_image, hr_image], axis=0)
    feats = hiera_lite_features(both_imgs, params)
    selected = [int(l) for l in layers if int(l) < len(feats)]

    mag_loss = jnp.float32(0.0)
    phase_loss = jnp.float32(0.0)
    for l in selected:
        m, p = fft_mag_phase_loss(feats[l])
        mag_loss = mag_loss + m
        phase_loss = phase_loss + p

    return alpha * mag_loss + (1.0 - alpha) * phase_loss


if __name__ == "__main__":
    key = jax.random.PRNGKey(0)
    k_sr, k_hr, k_w = jax.random.split(key, 3)

    B, C, H, W = 2, 3, 32, 32                     # small RGB images
    sr = jax.random.normal(k_sr, (B, C, H, W), jnp.float32)
    hr = jax.random.normal(k_hr, (B, C, H, W), jnp.float32)

    params = init_hiera_lite_params(k_w, in_chans=C, patch=4, embed_dim=32,
                                    num_stages=2)

    loss_fn = jax.jit(functools.partial(hiera_perceptual_loss_no_mse,
                                        layers=(1,), alpha=0.5))
    loss = loss_fn(sr, hr, params)
    loss = jax.block_until_ready(loss)
    assert loss.shape == () and jnp.isfinite(loss)
    print("KERNEL_OK")
</pallas_src>

<mosaic_0001>
module attributes {stable_mosaic.version = 11 : i64} {
  func.func @_linear_kernel(%arg0: i32, %arg1: memref<256x48xf32, #tpu.memory_space<vmem>>, %arg2: memref<48x128xbf16, #tpu.memory_space<vmem>>, %arg3: memref<1x128xf32, #tpu.memory_space<vmem>>, %arg4: memref<256x128xf32, #tpu.memory_space<vmem>>) attributes {dimension_semantics = [#tpu.dimension_semantics<parallel>], iteration_bounds = array<i64: 1>, scalar_prefetch = 0 : i64, scratch_operands = 0 : i64, tpu.core_type = #tpu.core_type<tc>, window_params = [{transform_indices = @transform_0, window_bounds = array<i64: 256, 48>}, {pipeline_mode = #tpu.pipeline_mode<synchronous>, transform_indices = @transform_1, window_bounds = array<i64: 48, 128>}, {pipeline_mode = #tpu.pipeline_mode<synchronous>, transform_indices = @transform_2, window_bounds = array<i64: 1, 128>}, {transform_indices = @transform_3, window_bounds = array<i64: 256, 128>}]} {
    %c0 = arith.constant 0 : index
    %c0_0 = arith.constant 0 : index
    %0 = vector.load %arg1[%c0, %c0_0] : memref<256x48xf32, #tpu.memory_space<vmem>>, vector<256x48xf32>
    %1 = arith.truncf %0 : vector<256x48xf32> to vector<256x48xbf16>
    %c0_1 = arith.constant 0 : index
    %c0_2 = arith.constant 0 : index
    %2 = vector.load %arg2[%c0_1, %c0_2] : memref<48x128xbf16, #tpu.memory_space<vmem>>, vector<48x128xbf16>
    %cst = arith.constant dense<0.000000e+00> : vector<256x128xf32>
    %3 = tpu.matmul %1, %2, %cst {dimension_numbers = #tpu.dot_dimension_numbers<[1], [0], [0], [1], [0, 0, 1, 1], [], []>} : vector<256x48xbf16>, vector<48x128xbf16>, vector<256x128xf32> -> vector<256x128xf32>
    %c0_3 = arith.constant 0 : index
    %c0_4 = arith.constant 0 : index
    %4 = vector.load %arg3[%c0_3, %c0_4] : memref<1x128xf32, #tpu.memory_space<vmem>>, vector<1x128xf32>
    %5 = vector.broadcast %4 : vector<1x128xf32> to vector<256x128xf32>
    %6 = arith.addf %3, %5 : vector<256x128xf32>
    %7 = arith.mulf %6, %6 : vector<256x128xf32>
    %8 = arith.mulf %6, %7 : vector<256x128xf32>
    %cst_5 = arith.constant 4.471500e-02 : f32
    %9 = vector.broadcast %cst_5 : f32 to vector<256x128xf32>
    %10 = arith.mulf %9, %8 : vector<256x128xf32>
    %11 = arith.addf %6, %10 : vector<256x128xf32>
    %cst_6 = arith.constant 0.797884583 : f32
    %12 = vector.broadcast %cst_6 : f32 to vector<256x128xf32>
    %13 = arith.mulf %12, %11 : vector<256x128xf32>
    %14 = math.tanh %13 : vector<256x128xf32>
    %cst_7 = arith.constant 1.000000e+00 : f32
    %15 = vector.broadcast %cst_7 : f32 to vector<256x128xf32>
    %16 = arith.addf %15, %14 : vector<256x128xf32>
    %cst_8 = arith.constant 5.000000e-01 : f32
    %17 = vector.broadcast %cst_8 : f32 to vector<256x128xf32>
    %18 = arith.mulf %17, %16 : vector<256x128xf32>
    %19 = arith.mulf %6, %18 : vector<256x128xf32>
    %c0_9 = arith.constant 0 : index
    %c0_10 = arith.constant 0 : index
    %20 = vector.load %arg4[%c0_9, %c0_10] : memref<256x128xf32, #tpu.memory_space<vmem>>, vector<256x128xf32>
    tpu.vector_store %arg4[%c0_9, %c0_10], %19 {strides = array<i32>} : memref<256x128xf32, #tpu.memory_space<vmem>>, vector<256x128xf32>,
    return
  }
  func.func @transform_0(%arg0: i32) -> (i32, i32) {
    %c0_i32 = arith.constant 0 : i32
    %c0_i32_0 = arith.constant 0 : i32
    return %arg0, %c0_i32 : i32, i32
  }
  func.func @transform_1(%arg0: i32) -> (i32, i32) {
    %c0_i32 = arith.constant 0 : i32
    %c0_i32_0 = arith.constant 0 : i32
    %c0_i32_1 = arith.constant 0 : i32
    return %c0_i32, %c0_i32_0 : i32, i32
  }
  func.func @transform_2(%arg0: i32) -> (i32, i32) {
    %c0_i32 = arith.constant 0 : i32
    %c0_i32_0 = arith.constant 0 : i32
    %c0_i32_1 = arith.constant 0 : i32
    return %c0_i32, %c0_i32_0 : i32, i32
  }
  func.func @transform_3(%arg0: i32) -> (i32, i32) {
    %c0_i32 = arith.constant 0 : i32
    %c0_i32_0 = arith.constant 0 : i32
    return %arg0, %c0_i32 : i32, i32
  }
}

module attributes {stable_mosaic.version = 11 : i64} {
  func.func @_linear_kernel(%arg0: i32, %arg1: memref<64x128xf32, #tpu.memory_space<vmem>>, %arg2: memref<128x128xbf16, #tpu.memory_space<vmem>>, %arg3: memref<1x128xf32, #tpu.memory_space<vmem>>, %arg4: memref<64x128xf32, #tpu.memory_space<vmem>>) attributes {dimension_semantics = [#tpu.dimension_semantics<parallel>], iteration_bounds = array<i64: 1>, scalar_prefetch = 0 : i64, scratch_operands = 0 : i64, tpu.core_type = #tpu.core_type<tc>, window_params = [{transform_indices = @transform_0, window_bounds = array<i64: 64, 128>}, {pipeline_mode = #tpu.pipeline_mode<synchronous>, transform_indices = @transform_1, window_bounds = array<i64: 128, 128>}, {pipeline_mode = #tpu.pipeline_mode<synchronous>, transform_indices = @transform_2, window_bounds = array<i64: 1, 128>}, {transform_indices = @transform_3, window_bounds = array<i64: 64, 128>}]} {
    %c0 = arith.constant 0 : index
    %c0_0 = arith.constant 0 : index
    %0 = vector.load %arg1[%c0, %c0_0] : memref<64x128xf32, #tpu.memory_space<vmem>>, vector<64x128xf32>
    %1 = arith.truncf %0 : vector<64x128xf32> to vector<64x128xbf16>
    %c0_1 = arith.constant 0 : index
    %c0_2 = arith.constant 0 : index
    %2 = vector.load %arg2[%c0_1, %c0_2] : memref<128x128xbf16, #tpu.memory_space<vmem>>, vector<128x128xbf16>
    %cst = arith.constant dense<0.000000e+00> : vector<64x128xf32>
    %3 = tpu.matmul %1, %2, %cst {dimension_numbers = #tpu.dot_dimension_numbers<[1], [0], [0], [1], [0, 0, 1, 1], [], []>} : vector<64x128xbf16>, vector<128x128xbf16>, vector<64x128xf32> -> vector<64x128xf32>
    %c0_3 = arith.constant 0 : index
    %c0_4 = arith.constant 0 : index
    %4 = vector.load %arg3[%c0_3, %c0_4] : memref<1x128xf32, #tpu.memory_space<vmem>>, vector<1x128xf32>
    %5 = vector.broadcast %4 : vector<1x128xf32> to vector<64x128xf32>
    %6 = arith.addf %3, %5 : vector<64x128xf32>
    %7 = arith.mulf %6, %6 : vector<64x128xf32>
    %8 = arith.mulf %6, %7 : vector<64x128xf32>
    %cst_5 = arith.constant 4.471500e-02 : f32
    %9 = vector.broadcast %cst_5 : f32 to vector<64x128xf32>
    %10 = arith.mulf %9, %8 : vector<64x128xf32>
    %11 = arith.addf %6, %10 : vector<64x128xf32>
    %cst_6 = arith.constant 0.797884583 : f32
    %12 = vector.broadcast %cst_6 : f32 to vector<64x128xf32>
    %13 = arith.mulf %12, %11 : vector<64x128xf32>
    %14 = math.tanh %13 : vector<64x128xf32>
    %cst_7 = arith.constant 1.000000e+00 : f32
    %15 = vector.broadcast %cst_7 : f32 to vector<64x128xf32>
    %16 = arith.addf %15, %14 : vector<64x128xf32>
    %cst_8 = arith.constant 5.000000e-01 : f32
    %17 = vector.broadcast %cst_8 : f32 to vector<64x128xf32>
    %18 = arith.mulf %17, %16 : vector<64x128xf32>
    %19 = arith.mulf %6, %18 : vector<64x128xf32>
    %c0_9 = arith.constant 0 : index
    %c0_10 = arith.constant 0 : index
    %20 = vector.load %arg4[%c0_9, %c0_10] : memref<64x128xf32, #tpu.memory_space<vmem>>, vector<64x128xf32>
    tpu.vector_store %arg4[%c0_9, %c0_10], %19 {strides = array<i32>} : memref<64x128xf32, #tpu.memory_space<vmem>>, vector<64x128xf32>,
    return
  }
  func.func @transform_0(%arg0: i32) -> (i32, i32) {
    %c0_i32 = arith.constant 0 : i32
    %c0_i32_0 = arith.constant 0 : i32
    return %arg0, %c0_i32 : i32, i32
  }
  func.func @transform_1(%arg0: i32) -> (i32, i32) {
    %c0_i32 = arith.constant 0 : i32
    %c0_i32_0 = arith.constant 0 : i32
    %c0_i32_1 = arith.constant 0 : i32
    return %c0_i32, %c0_i32_0 : i32, i32
  }
  func.func @transform_2(%arg0: i32) -> (i32, i32) {
    %c0_i32 = arith.constant 0 : i32
    %c0_i32_0 = arith.constant 0 : i32
    %c0_i32_1 = arith.constant 0 : i32
    return %c0_i32, %c0_i32_0 : i32, i32
  }
  func.func @transform_3(%arg0: i32) -> (i32, i32) {
    %c0_i32 = arith.constant 0 : i32
    %c0_i32_0 = arith.constant 0 : i32
    return %arg0, %c0_i32 : i32, i32
  }
}

module attributes {stable_mosaic.version = 11 : i64} {
  func.func @_fft_mag_phase_loss_kernel(%arg0: i32, %arg1: i32, %arg2: memref<32x64xf32, #tpu.memory_space<vmem>>, %arg3: memref<32x32xf32, #tpu.memory_space<vmem>>, %arg4: memref<32x32xf32, #tpu.memory_space<vmem>>, %arg5: memref<64x64xf32, #tpu.memory_space<vmem>>, %arg6: memref<64x64xf32, #tpu.memory_space<vmem>>, %arg7: memref<1x1x1xf32, #tpu.memory_space<vmem>>, %arg8: memref<1x1x1xf32, #tpu.memory_space<vmem>>, %arg9: memref<16x64xf32, #tpu.memory_space<vmem>>, %arg10: memref<16x64xf32, #tpu.memory_space<vmem>>) attributes {dimension_semantics = [#tpu.dimension_semantics<parallel>, #tpu.dimension_semantics<arbitrary>], iteration_bounds = array<i64: 2, 1>, scalar_prefetch = 0 : i64, scratch_operands = 2 : i64, tpu.core_type = #tpu.core_type<tc>, window_params = [{transform_indices = @transform_0, window_bounds = array<i64: 32, 64>}, {pipeline_mode = #tpu.pipeline_mode<synchronous>, transform_indices = @transform_1, window_bounds = array<i64: 32, 32>}, {pipeline_mode = #tpu.pipeline_mode<synchronous>, transform_indices = @transform_2, window_bounds = array<i64: 32, 32>}, {pipeline_mode = #tpu.pipeline_mode<synchronous>, transform_indices = @transform_3, window_bounds = array<i64: 64, 64>}, {pipeline_mode = #tpu.pipeline_mode<synchronous>, transform_indices = @transform_4, window_bounds = array<i64: 64, 64>}, {transform_indices = @transform_5, window_bounds = array<i64: 1, 1, 1>}, {transform_indices = @transform_6, window_bounds = array<i64: 1, 1, 1>}]} {
    %c0_i32 = arith.constant 0 : i32
    %0 = arith.cmpi eq, %arg1, %c0_i32 : i32
    %1 = arith.extui %0 : i1 to i32
    %c0_i32_0 = arith.constant 0 : i32
    %2 = arith.cmpi ne, %1, %c0_i32_0 : i32
    scf.if %2 {
      %cst_25 = arith.constant 0.000000e+00 : f32
      %38 = vector.broadcast %cst_25 : f32 to vector<16x64xf32>
      %c0_26 = arith.constant 0 : index
      %c0_27 = arith.constant 0 : index
      %39 = vector.load %arg9[%c0_26, %c0_27] : memref<16x64xf32, #tpu.memory_space<vmem>>, vector<16x64xf32>
      tpu.vector_store %arg9[%c0_26, %c0_27], %38 {strides = array<i32>} : memref<16x64xf32, #tpu.memory_space<vmem>>, vector<16x64xf32>,
      %cst_28 = arith.constant 0.000000e+00 : f32
      %40 = vector.broadcast %cst_28 : f32 to vector<16x64xf32>
      %c0_29 = arith.constant 0 : index
      %c0_30 = arith.constant 0 : index
      %41 = vector.load %arg10[%c0_29, %c0_30] : memref<16x64xf32, #tpu.memory_space<vmem>>, vector<16x64xf32>
      tpu.vector_store %arg10[%c0_29, %c0_30], %40 {strides = array<i32>} : memref<16x64xf32, #tpu.memory_space<vmem>>, vector<16x64xf32>,
    } else {
    }
    %c0 = arith.constant 0 : index
    %c0_1 = arith.constant 0 : index
    %3 = vector.load %arg2[%c0, %c0_1] : memref<32x64xf32, #tpu.memory_space<vmem>>, vector<32x64xf32>
    %c0_2 = arith.constant 0 : index
    %c0_3 = arith.constant 0 : index
    %4 = vector.load %arg5[%c0_2, %c0_3] : memref<64x64xf32, #tpu.memory_space<vmem>>, vector<64x64xf32>
    %c0_4 = arith.constant 0 : index
    %c0_5 = arith.constant 0 : index
    %5 = vector.load %arg6[%c0_4, %c0_5] : memref<64x64xf32, #tpu.memory_space<vmem>>, vector<64x64xf32>
    %c0_6 = arith.constant 0 : index
    %c0_7 = arith.constant 0 : index
    %6 = vector.load %arg3[%c0_6, %c0_7] : memref<32x32xf32, #tpu.memory_space<vmem>>, vector<32x32xf32>
    %c0_8 = arith.constant 0 : index
    %c0_9 = arith.constant 0 : index
    %7 = vector.load %arg4[%c0_8, %c0_9] : memref<32x32xf32, #tpu.memory_space<vmem>>, vector<32x32xf32>
    %cst = arith.constant dense<0.000000e+00> : vector<32x64xf32>
    %8 = tpu.matmul %3, %4, %cst {dimension_numbers = #tpu.dot_dimension_numbers<[1], [0], [0], [1], [0, 0, 1, 1], [], []>} : vector<32x64xf32>, vector<64x64xf32>, vector<32x64xf32> -> vector<32x64xf32>
    %cst_10 = arith.constant dense<0.000000e+00> : vector<32x64xf32>
    %9 = tpu.matmul %3, %5, %cst_10 {dimension_numbers = #tpu.dot_dimension_numbers<[1], [0], [0], [1], [0, 0, 1, 1], [], []>} : vector<32x64xf32>, vector<64x64xf32>, vector<32x64xf32> -> vector<32x64xf32>
    %cst_11 = arith.constant dense<0.000000e+00> : vector<32x64xf32>
    %10 = tpu.matmul %6, %8, %cst_11 {dimension_numbers = #tpu.dot_dimension_numbers<[1], [0], [0], [1], [0, 0, 1, 1], [], []>} : vector<32x32xf32>, vector<32x64xf32>, vector<32x64xf32> -> vector<32x64xf32>
    %cst_12 = arith.constant dense<0.000000e+00> : vector<32x64xf32>
    %11 = tpu.matmul %7, %9, %cst_12 {dimension_numbers = #tpu.dot_dimension_numbers<[1], [0], [0], [1], [0, 0, 1, 1], [], []>} : vector<32x32xf32>, vector<32x64xf32>, vector<32x64xf32> -> vector<32x64xf32>
    %12 = arith.subf %10, %11 : vector<32x64xf32>
    %cst_13 = arith.constant dense<0.000000e+00> : vector<32x64xf32>
    %13 = tpu.matmul %6, %9, %cst_13 {dimension_numbers = #tpu.dot_dimension_numbers<[1], [0], [0], [1], [0, 0, 1, 1], [], []>} : vector<32x32xf32>, vector<32x64xf32>, vector<32x64xf32> -> vector<32x64xf32>
    %cst_14 = arith.constant dense<0.000000e+00> : vector<32x64xf32>
    %14 = tpu.matmul %7, %8, %cst_14 {dimension_numbers = #tpu.dot_dimension_numbers<[1], [0], [0], [1], [0, 0, 1, 1], [], []>} : vector<32x32xf32>, vector<32x64xf32>, vector<32x64xf32> -> vector<32x64xf32>
    %15 = arith.addf %13, %14 : vector<32x64xf32>
    %16 = arith.mulf %12, %12 : vector<32x64xf32>
    %17 = arith.mulf %15, %15 : vector<32x64xf32>
    %18 = arith.addf %16, %17 : vector<32x64xf32>
    %19 = math.sqrt %18 : vector<32x64xf32>
    %20 = math.atan2 %15, %12 : vector<32x64xf32>
    %c0_15 = arith.constant 0 : index
    %c0_16 = arith.constant 0 : index
    %21 = vector.load %arg9[%c0_15, %c0_16] : memref<16x64xf32, #tpu.memory_space<vmem>>, vector<16x64xf32>
    %22 = vector.extract_strided_slice %19 {offsets = [0, 0], sizes = [16, 64], strides = [1, 1]} : vector<32x64xf32> to vector<16x64xf32>
    %23 = vector.extract_strided_slice %19 {offsets = [16, 0], sizes = [16, 64], strides = [1, 1]} : vector<32x64xf32> to vector<16x64xf32>
    %24 = arith.subf %22, %23 : vector<16x64xf32>
    %25 = math.absf %24 : vector<16x64xf32>
    %26 = arith.addf %21, %25 : vector<16x64xf32>
    %c0_17 = arith.constant 0 : index
    %c0_18 = arith.constant 0 : index
    %27 = vector.load %arg9[%c0_17, %c0_18] : memref<16x64xf32, #tpu.memory_space<vmem>>, vector<16x64xf32>
    tpu.vector_store %arg9[%c0_17, %c0_18], %26 {strides = array<i32>} : memref<16x64xf32, #tpu.memory_space<vmem>>, vector<16x64xf32>,
    %c0_19 = arith.constant 0 : index
    %c0_20 = arith.constant 0 : index
    %28 = vector.load %arg10[%c0_19, %c0_20] : memref<16x64xf32, #tpu.memory_space<vmem>>, vector<16x64xf32>
    %29 = vector.extract_strided_slice %20 {offsets = [0, 0], sizes = [16, 64], strides = [1, 1]} : vector<32x64xf32> to vector<16x64xf32>
    %30 = vector.extract_strided_slice %20 {offsets = [16, 0], sizes = [16, 64], strides = [1, 1]} : vector<32x64xf32> to vector<16x64xf32>
    %31 = arith.subf %29, %30 : vector<16x64xf32>
    %32 = math.absf %31 : vector<16x64xf32>
    %33 = arith.addf %28, %32 : vector<16x64xf32>
    %c0_21 = arith.constant 0 : index
    %c0_22 = arith.constant 0 : index
    %34 = vector.load %arg10[%c0_21, %c0_22] : memref<16x64xf32, #tpu.memory_space<vmem>>, vector<16x64xf32>
    tpu.vector_store %arg10[%c0_21, %c0_22], %33 {strides = array<i32>} : memref<16x64xf32, #tpu.memory_space<vmem>>, vector<16x64xf32>,
    %c0_i32_23 = arith.constant 0 : i32
    %35 = arith.cmpi eq, %arg1, %c0_i32_23 : i32
    %36 = arith.extui %35 : i1 to i32
    %c0_i32_24 = arith.constant 0 : i32
    %37 = arith.cmpi ne, %36, %c0_i32_24 : i32
    scf.if %37 {
      %c0_25 = arith.constant 0 : index
      %c0_26 = arith.constant 0 : index
      %38 = vector.load %arg9[%c0_25, %c0_26] : memref<16x64xf32, #tpu.memory_space<vmem>>, vector<16x64xf32>
      %39 = vector.shape_cast %38 : vector<16x64xf32> to vector<1x16x64xf32>
      %cst_27 = arith.constant dense<0.000000e+00> : vector<1xf32>
      %40 = vector.multi_reduction <add>, %39, %cst_27 [1, 2] : vector<1x16x64xf32> to vector<1xf32>
      %41 = vector.shape_cast %40 : vector<1xf32> to vector<1x1x1xf32>
      %42 = vector.extract %41[0, 0, 0] : f32 from vector<1x1x1xf32>
      %43 = vector.broadcast %42 : f32 to vector<1x1x1xf32>
      %c0_28 = arith.constant 0 : index
      %c0_29 = arith.constant 0 : index
      %c0_30 = arith.constant 0 : index
      %44 = vector.load %arg7[%c0_28, %c0_29, %c0_30] : memref<1x1x1xf32, #tpu.memory_space<vmem>>, vector<1x1x1xf32>
      tpu.vector_store %arg7[%c0_28, %c0_29, %c0_30], %43 {strides = array<i32>} : memref<1x1x1xf32, #tpu.memory_space<vmem>>, vector<1x1x1xf32>,
      %c0_31 = arith.constant 0 : index
      %c0_32 = arith.constant 0 : index
      %45 = vector.load %arg10[%c0_31, %c0_32] : memref<16x64xf32, #tpu.memory_space<vmem>>, vector<16x64xf32>
      %46 = vector.shape_cast %45 : vector<16x64xf32> to vector<1x16x64xf32>
      %cst_33 = arith.constant dense<0.000000e+00> : vector<1xf32>
      %47 = vector.multi_reduction <add>, %46, %cst_33 [1, 2] : vector<1x16x64xf32> to vector<1xf32>
      %48 = vector.shape_cast %47 : vector<1xf32> to vector<1x1x1xf32>
      %49 = vector.extract %48[0, 0, 0] : f32 from vector<1x1x1xf32>
      %50 = vector.broadcast %49 : f32 to vector<1x1x1xf32>
      %c0_34 = arith.constant 0 : index
      %c0_35 = arith.constant 0 : index
      %c0_36 = arith.constant 0 : index
      %51 = vector.load %arg8[%c0_34, %c0_35, %c0_36] : memref<1x1x1xf32, #tpu.memory_space<vmem>>, vector<1x1x1xf32>
      tpu.vector_store %arg8[%c0_34, %c0_35, %c0_36], %50 {strides = array<i32>} : memref<1x1x1xf32, #tpu.memory_space<vmem>>, vector<1x1x1xf32>,
    } else {
    }
    return
  }
  func.func @transform_0(%arg0: i32, %arg1: i32) -> (i32, i32) {
    %c1_i32 = arith.constant 1 : i32
    %0 = arith.muli %arg0, %c1_i32 : i32
    %1 = arith.addi %0, %arg1 : i32
    %c0_i32 = arith.constant 0 : i32
    %c0_i32_0 = arith.constant 0 : i32
    return %1, %c0_i32 : i32, i32
  }
  func.func @transform_1(%arg0: i32, %arg1: i32) -> (i32, i32) {
    %c0_i32 = arith.constant 0 : i32
    %c0_i32_0 = arith.constant 0 : i32
    %c0_i32_1 = arith.constant 0 : i32
    return %c0_i32, %c0_i32_0 : i32, i32
  }
  func.func @transform_2(%arg0: i32, %arg1: i32) -> (i32, i32) {
    %c0_i32 = arith.constant 0 : i32
    %c0_i32_0 = arith.constant 0 : i32
    %c0_i32_1 = arith.constant 0 : i32
    return %c0_i32, %c0_i32_0 : i32, i32
  }
  func.func @transform_3(%arg0: i32, %arg1: i32) -> (i32, i32) {
    %c0_i32 = arith.constant 0 : i32
    %c0_i32_0 = arith.constant 0 : i32
    %c0_i32_1 = arith.constant 0 : i32
    return %c0_i32, %c0_i32_0 : i32, i32
  }
  func.func @transform_4(%arg0: i32, %arg1: i32) -> (i32, i32) {
    %c0_i32 = arith.constant 0 : i32
    %c0_i32_0 = arith.constant 0 : i32
    %c0_i32_1 = arith.constant 0 : i32
    return %c0_i32, %c0_i32_0 : i32, i32
  }
  func.func @transform_5(%arg0: i32, %arg1: i32) -> (i32, i32, i32) {
    %c0_i32 = arith.constant 0 : i32
    %c0_i32_0 = arith.constant 0 : i32
    %c0_i32_1 = arith.constant 0 : i32
    return %arg0, %c0_i32, %c0_i32_0 : i32, i32, i32
  }
  func.func @transform_6(%arg0: i32, %arg1: i32) -> (i32, i32, i32) {
    %c0_i32 = arith.constant 0 : i32
    %c0_i32_0 = arith.constant 0 : i32
    %c0_i32_1 = arith.constant 0 : i32
    return %arg0, %c0_i32, %c0_i32_0 : i32, i32, i32
  }
}

</mosaic_0001>

<llo_original>
// kernel: hiera_perceptual_loss_no_mse.3
$region0: #{hiera_perceptual_loss_no_mse.3}
  #allocation0 [shape = 'u32[]', space=smem, size = 0x4, offset = 0x4, fixed_abs, tag = 'smem constant byte address 0x4 - core index']
  #allocation1 [shape = 'u32[72,128]{1,0:T(1,128)}', space=vmem, size = 0x9000, scoped, tag = 'internal scratch']
  %s0 = inlined_call_operand.vmem [shape: f32[256,48], index: 0, kind: input, shape index: {}]
  %s1 = inlined_call_operand.vmem [shape: bf16[48,128], index: 1, kind: input, shape index: {}]
  %s2 = inlined_call_operand.vmem [shape: f32[1,128], index: 2, kind: input, shape index: {}]
  %s3 = inlined_call_operand.vmem [shape: f32[256,128], index: 3, kind: output, shape index: {}]
  %s4 = sld [smem:[#allocation0]]
  $region22: #{hiera_perceptual_loss_no_mse.3} parent=0
    _
  %s6 = ssub.s32 1, %s4
  %s7 = scalar_select 0, %s6, %s4
  // Predicated region
  $region2: #{hiera_perceptual_loss_no_mse.3} parent=0 // pred_check
    _
  $region3: #{hiera_perceptual_loss_no_mse.3} parent=0 // pred_check_branch
    %9 = sbr.rel (0) target = $region5
  $region4: #{hiera_perceptual_loss_no_mse.3} parent=0 // pred_region
    _
  $region5: #{hiera_perceptual_loss_no_mse.3} parent=0 // pred_fallthru
    _
  // Predicated region
  $region6: #{hiera_perceptual_loss_no_mse.3} parent=0 // pred_check
    _
  $region7: #{hiera_perceptual_loss_no_mse.3} parent=0 // pred_check_branch
    %11 = sbr.rel (0) target = $region9
  $region8: #{hiera_perceptual_loss_no_mse.3} parent=0 // pred_region
    _
  $region9: #{hiera_perceptual_loss_no_mse.3} parent=0 // pred_fallthru
    _
  // Predicated region
  $region10: #{hiera_perceptual_loss_no_mse.3} parent=0 // pred_check
    _
  $region11: #{hiera_perceptual_loss_no_mse.3} parent=0 // pred_check_branch
    %13 = sbr.rel (0) target = $region13
  $region12: #{hiera_perceptual_loss_no_mse.3} parent=0 // pred_region
    _
  $region13: #{hiera_perceptual_loss_no_mse.3} parent=0 // pred_fallthru
    _
  %v15 = vld [vmem:[%s0] sm:$0xff]
  %v16 = vld [vmem:[%s0 + $0x8] sm:$0xff]
  %v17 = vld [vmem:[%s0 + $0x10] sm:$0xff]
  %v18 = vld [vmem:[%s0 + $0x18] sm:$0xff]
  %v19 = vld [vmem:[%s0 + $0x20] sm:$0xff]
  %v20 = vld [vmem:[%s0 + $0x28] sm:$0xff]
  %v21 = vld [vmem:[%s0 + $0x30] sm:$0xff]
  %v22 = vld [vmem:[%s0 + $0x38] sm:$0xff]
  %v23 = vld [vmem:[%s0 + $0x40] sm:$0xff]
  %v24 = vld [vmem:[%s0 + $0x48] sm:$0xff]
  %v25 = vld [vmem:[%s0 + $0x50] sm:$0xff]
  %v26 = vld [vmem:[%s0 + $0x58] sm:$0xff]
  %v27 = vld [vmem:[%s0 + $0x60] sm:$0xff]
  %v28 = vld [vmem:[%s0 + $0x68] sm:$0xff]
  %v29 = vld [vmem:[%s0 + $0x70] sm:$0xff]
  %v30 = vld [vmem:[%s0 + $0x78] sm:$0xff]
  %v31 = vld [vmem:[%s0 + $0x80] sm:$0xff]
  %v32 = vld [vmem:[%s0 + $0x88] sm:$0xff]
  %v33 = vld [vmem:[%s0 + $0x90] sm:$0xff]
  %v34 = vld [vmem:[%s0 + $0x98] sm:$0xff]
  %v35 = vld [vmem:[%s0 + $0xa0] sm:$0xff]
  %v36 = vld [vmem:[%s0 + $0xa8] sm:$0xff]
  %v37 = vld [vmem:[%s0 + $0xb0] sm:$0xff]
  %v38 = vld [vmem:[%s0 + $0xb8] sm:$0xff]
  %v39 = vld [vmem:[%s0 + $0xc0] sm:$0xff]
  %v40 = vld [vmem:[%s0 + $0xc8] sm:$0xff]
  %v41 = vld [vmem:[%s0 + $0xd0] sm:$0xff]
  %v42 = vld [vmem:[%s0 + $0xd8] sm:$0xff]
  %v43 = vld [vmem:[%s0 + $0xe0] sm:$0xff]
  %v44 = vld [vmem:[%s0 + $0xe8] sm:$0xff]
  %v45 = vld [vmem:[%s0 + $0xf0] sm:$0xff]
  %v46 = vld [vmem:[%s0 + $0xf8] sm:$0xff]
  %v47 = vpack.c.bf16 %v16, %v15
  %v48 = vpack.c.bf16 %v18, %v17
  %v49 = vpack.c.bf16 %v20, %v19
  %v50 = vpack.c.bf16 %v22, %v21
  %v51 = vpack.c.bf16 %v24, %v23
  %v52 = vpack.c.bf16 %v26, %v25
  %v53 = vpack.c.bf16 %v28, %v27
  %v54 = vpack.c.bf16 %v30, %v29
  %v55 = vpack.c.bf16 %v32, %v31
  %v56 = vpack.c.bf16 %v34, %v33
  %v57 = vpack.c.bf16 %v36, %v35
  %v58 = vpack.c.bf16 %v38, %v37
  %v59 = vpack.c.bf16 %v40, %v39
  %v60 = vpack.c.bf16 %v42, %v41
  %v61 = vpack.c.bf16 %v44, %v43
  %v62 = vpack.c.bf16 %v46, %v45
  %v63 = vld [vmem:[%s1] sm:$0xf]
  %v64 = vld [vmem:[%s1 + $0x4] sm:$0xf]
  %v65 = vld [vmem:[%s1 + $0x8] sm:$0xf]
  %v66 = vld [vmem:[%s1 + $0xc] sm:$0xf]
  %v67 = vld [vmem:[%s1 + $0x10] sm:$0xf]
  %v68 = vld [vmem:[%s1 + $0x14] sm:$0xf]
  %v69 = vld [vmem:[%s2] sm:$0x1]
  %v71 = vperm.slane %v69, 0
  %v79 = vunpack.c.l.b16 %v63
  %v80 = vunpack.c.l.b16 %v64
  %v81 = vunpack.c.l.b16 %v65
  %v82 = vunpack.c.l.b16 %v66
  %v83 = vunpack.c.l.b16 %v67
  %v84 = vunpack.c.l.b16 %v68
  %v85 = vpack.c.b16 %v80, %v79
  %v86 = vpack.c.b16 %v82, %v81
  %v87 = vpack.c.b16 %v84, %v83
  %vm91 = vcmask 392192
  %v93 = vsel %vm91, %v47, 0
  %v96 = vsel %vm91, %v48, 0
  %v99 = vsel %vm91, %v49, 0
  %v102 = vsel %vm91, %v50, 0
  %v105 = vsel %vm91, %v51, 0
  %v108 = vsel %vm91, %v52, 0
  %v111 = vsel %vm91, %v53, 0
  %v114 = vsel %vm91, %v54, 0
  %v117 = vsel %vm91, %v55, 0
  %v120 = vsel %vm91, %v56, 0
  %v123 = vsel %vm91, %v57, 0
  %v126 = vsel %vm91, %v58, 0
  %v129 = vsel %vm91, %v59, 0
  %v132 = vsel %vm91, %v60, 0
  %v135 = vsel %vm91, %v61, 0
  %v138 = vsel %vm91, %v62, 0
  %140 = vmatpush.bf16.msra.mxu0 0
  %141 = vmatpush.bf16.msra.mxu0 0
  %142 = vmatpush.bf16.msra.mxu0 0
  %143 = vmatpush.bf16.msra.mxu0 0
  %144 = vmatpush.bf16.msra.mxu0 0
  %145 = vmatpush.bf16.msra.mxu0 %v87
  %146 = vmatpush.bf16.msra.mxu0 %v86
  %147 = vmatpush.bf16.msra.mxu0 %v85
  %148 = vmatmul.bf16.gmra.mxu0 %v93
  %v149 = vpop.f32.mrf.mxu0
  %v150 = vadd.f32 %v71, %v149
  %v151 = vpop.f32.mrf.mxu0
  %v152 = vadd.f32 %v71, %v151
  %153 = vmatmul.bf16.gmra.mxu0 %v96
  %v154 = vpop.f32.mrf.mxu0
  %v155 = vadd.f32 %v71, %v154
  %v156 = vpop.f32.mrf.mxu0
  %v157 = vadd.f32 %v71, %v156
  %158 = vmatmul.bf16.gmra.mxu0 %v99
  %v159 = vpop.f32.mrf.mxu0
  %v160 = vadd.f32 %v71, %v159
  %v161 = vpop.f32.mrf.mxu0
  %v162 = vadd.f32 %v71, %v161
  %163 = vmatmul.bf16.gmra.mxu0 %v102
  %v164 = vpop.f32.mrf.mxu0
  %v165 = vadd.f32 %v71, %v164
  %v166 = vpop.f32.mrf.mxu0
  %v167 = vadd.f32 %v71, %v166
  %168 = vmatmul.bf16.gmra.mxu0 %v105
  %v169 = vpop.f32.mrf.mxu0
  %v170 = vadd.f32 %v71, %v169
  %v171 = vpop.f32.mrf.mxu0
  %v172 = vadd.f32 %v71, %v171
  %173 = vmatmul.bf16.gmra.mxu0 %v108
  %v174 = vpop.f32.mrf.mxu0
  %v175 = vadd.f32 %v71, %v174
  %v176 = vpop.f32.mrf.mxu0
  %v177 = vadd.f32 %v71, %v176
  %178 = vmatmul.bf16.gmra.mxu0 %v111
  %v179 = vpop.f32.mrf.mxu0
  %v180 = vadd.f32 %v71, %v179
  %v181 = vpop.f32.mrf.mxu0
  %v182 = vadd.f32 %v71, %v181
  %183 = vmatmul.bf16.gmra.mxu0 %v114
  %v184 = vpop.f32.mrf.mxu0
  %v185 = vadd.f32 %v71, %v184
  %v186 = vpop.f32.mrf.mxu0
  %v187 = vadd.f32 %v71, %v186
  %188 = vmatmul.bf16.gmra.mxu0 %v117
  %v189 = vpop.f32.mrf.mxu0
  %v190 = vadd.f32 %v71, %v189
  %v191 = vpop.f32.mrf.mxu0
  %v192 = vadd.f32 %v71, %v191
  %193 = vmatmul.bf16.gmra.mxu0 %v120
  %v194 = vpop.f32.mrf.mxu0
  %v195 = vadd.f32 %v71, %v194
  %v196 = vpop.f32.mrf.mxu0
  %v197 = vadd.f32 %v71, %v196
  %198 = vmatmul.bf16.gmra.mxu0 %v123
  %v199 = vpop.f32.mrf.mxu0
  %v200 = vadd.f32 %v71, %v199
  %v201 = vpop.f32.mrf.mxu0
  %v202 = vadd.f32 %v71, %v201
  %203 = vmatmul.bf16.gmra.mxu0 %v126
  %v204 = vpop.f32.mrf.mxu0
  %v205 = vadd.f32 %v71, %v204
  %v206 = vpop.f32.mrf.mxu0
  %v207 = vadd.f32 %v71, %v206
  %208 = vmatmul.bf16.gmra.mxu0 %v129
  %v209 = vpop.f32.mrf.mxu0
  %v210 = vadd.f32 %v71, %v209
  %v211 = vpop.f32.mrf.mxu0
  %v212 = vadd.f32 %v71, %v211
  %213 = vmatmul.bf16.gmra.mxu0 %v132
  %v214 = vpop.f32.mrf.mxu0
  %v215 = vadd.f32 %v71, %v214
  %v216 = vpop.f32.mrf.mxu0
  %v217 = vadd.f32 %v71, %v216
  %218 = vmatmul.bf16.gmra.mxu0 %v135
  %v219 = vpop.f32.mrf.mxu0
  %v220 = vadd.f32 %v71, %v219
  %v221 = vpop.f32.mrf.mxu0
  %v222 = vadd.f32 %v71, %v221
  %223 = vmatmul.bf16.gmra.mxu0 %v138
  %v224 = vpop.f32.mrf.mxu0
  %v225 = vadd.f32 %v71, %v224
  %v226 = vpop.f32.mrf.mxu0
  %v227 = vadd.f32 %v71, %v226
  %228 = vdwg.mxu0
  %v229 = vmul.f32 %v150, %v150
  %v230 = vmul.f32 %v152, %v152
  %v231 = vmul.f32 %v155, %v155
  %v232 = vmul.f32 %v157, %v157
  %v233 = vmul.f32 %v160, %v160
  %v234 = vmul.f32 %v162, %v162
  %v235 = vmul.f32 %v165, %v165
  %v236 = vmul.f32 %v167, %v167
  %v237 = vmul.f32 %v170, %v170
  %v238 = vmul.f32 %v172, %v172
  %v239 = vmul.f32 %v175, %v175
  %v240 = vmul.f32 %v177, %v177
  %v241 = vmul.f32 %v180, %v180
  %v242 = vmul.f32 %v182, %v182
  %v243 = vmul.f32 %v185, %v185
  %v244 = vmul.f32 %v187, %v187
  %v245 = vmul.f32 %v190, %v190
  %v246 = vmul.f32 %v192, %v192
  %v247 = vmul.f32 %v195, %v195
  %v248 = vmul.f32 %v197, %v197
  %v249 = vmul.f32 %v200, %v200
  %v250 = vmul.f32 %v202, %v202
  %v251 = vmul.f32 %v205, %v205
  %v252 = vmul.f32 %v207, %v207
  %v253 = vmul.f32 %v210, %v210
  %v254 = vmul.f32 %v212, %v212
  %v255 = vmul.f32 %v215, %v215
  %v256 = vmul.f32 %v217, %v217
  %v257 = vmul.f32 %v220, %v220
  %v258 = vmul.f32 %v222, %v222
  %v259 = vmul.f32 %v225, %v225
  %v260 = vmul.f32 %v227, %v227
  %v261 = vmul.f32 %v150, %v229
  %v262 = vmul.f32 %v152, %v230
  %v263 = vmul.f32 %v155, %v231
  %v264 = vmul.f32 %v157, %v232
  %v265 = vmul.f32 %v160, %v233
  %v266 = vmul.f32 %v162, %v234
  %v267 = vmul.f32 %v165, %v235
  %v268 = vmul.f32 %v167, %v236
  %v269 = vmul.f32 %v170, %v237
  %v270 = vmul.f32 %v172, %v238
  %v271 = vmul.f32 %v175, %v239
  %v272 = vmul.f32 %v177, %v240
  %v273 = vmul.f32 %v180, %v241
  %v274 = vmul.f32 %v182, %v242
  %v275 = vmul.f32 %v185, %v243
  %v276 = vmul.f32 %v187, %v244
  %v277 = vmul.f32 %v190, %v245
  %v278 = vmul.f32 %v192, %v246
  %v279 = vmul.f32 %v195, %v247
  %v280 = vmul.f32 %v197, %v248
  %v281 = vmul.f32 %v200, %v249
  %v282 = vmul.f32 %v202, %v250
  %v283 = vmul.f32 %v205, %v251
  %v284 = vmul.f32 %v207, %v252
  %v285 = vmul.f32 %v210, %v253
  %v286 = vmul.f32 %v212, %v254
  %v287 = vmul.f32 %v215, %v255
  %v288 = vmul.f32 %v217, %v256
  %v289 = vmul.f32 %v220, %v257
  %v290 = vmul.f32 %v222, %v258
  %v291 = vmul.f32 %v225, %v259
  %v292 = vmul.f32 %v227, %v260
  %v293 = vmul.f32 %v261, 0.044715
  %v294 = vmul.f32 %v262, 0.044715
  %v295 = vmul.f32 %v263, 0.044715
  %v296 = vmul.f32 %v264, 0.044715
  %v297 = vmul.f32 %v265, 0.044715
  %v298 = vmul.f32 %v266, 0.044715
  %v299 = vmul.f32 %v267, 0.044715
  %v300 = vmul.f32 %v268, 0.044715
  %v301 = vmul.f32 %v269, 0.044715
  %v302 = vmul.f32 %v270, 0.044715
  %v303 = vmul.f32 %v271, 0.044715
  %v304 = vmul.f32 %v272, 0.044715
  %v305 = vmul.f32 %v273, 0.044715
  %v306 = vmul.f32 %v274, 0.044715
  %v307 = vmul.f32 %v275, 0.044715
  %v308 = vmul.f32 %v276, 0.044715
  %v309 = vmul.f32 %v277, 0.044715
  %v310 = vmul.f32 %v278, 0.044715
  %v311 = vmul.f32 %v279, 0.044715
  %v312 = vmul.f32 %v280, 0.044715
  %v313 = vmul.f32 %v281, 0.044715
  %v314 = vmul.f32 %v282, 0.044715
  %v315 = vmul.f32 %v283, 0.044715
  %v316 = vmul.f32 %v284, 0.044715
  %v317 = vmul.f32 %v285, 0.044715
  %v318 = vmul.f32 %v286, 0.044715
  %v319 = vmul.f32 %v287, 0.044715
  %v320 = vmul.f32 %v288, 0.044715
  %v321 = vmul.f32 %v289, 0.044715
  %v322 = vmul.f32 %v290, 0.044715
  %v323 = vmul.f32 %v291, 0.044715
  %v324 = vmul.f32 %v292, 0.044715
  %v325 = vadd.f32 %v150, %v293
  %v326 = vadd.f32 %v152, %v294
  %v327 = vadd.f32 %v155, %v295
  %v328 = vadd.f32 %v157, %v296
  %v329 = vadd.f32 %v160, %v297
  %v330 = vadd.f32 %v162, %v298
  %v331 = vadd.f32 %v165, %v299
  %v332 = vadd.f32 %v167, %v300
  %v333 = vadd.f32 %v170, %v301
  %v334 = vadd.f32 %v172, %v302
  %v335 = vadd.f32 %v175, %v303
  %v336 = vadd.f32 %v177, %v304
  %v337 = vadd.f32 %v180, %v305
  %v338 = vadd.f32 %v182, %v306
  %v339 = vadd.f32 %v185, %v307
  %v340 = vadd.f32 %v187, %v308
  %v341 = vadd.f32 %v190, %v309
  %v342 = vadd.f32 %v192, %v310
  %v343 = vadd.f32 %v195, %v311
  %v344 = vadd.f32 %v197, %v312
  %v345 = vadd.f32 %v200, %v313
  %v346 = vadd.f32 %v202, %v314
  %v347 = vadd.f32 %v205, %v315
  %v348 = vadd.f32 %v207, %v316
  %v349 = vadd.f32 %v210, %v317
  %v350 = vadd.f32 %v212, %v318
  %v351 = vadd.f32 %v215, %v319
  %v352 = vadd.f32 %v217, %v320
  %v353 = vadd.f32 %v220, %v321
  %v354 = vadd.f32 %v222, %v322
  %v355 = vadd.f32 %v225, %v323
  %v356 = vadd.f32 %v227, %v324
  %v357 = vmul.f32 %v325, 0.7978846
  %v358 = vmul.f32 %v326, 0.7978846
  %v359 = vmul.f32 %v327, 0.7978846
  %v360 = vmul.f32 %v328, 0.7978846
  %v361 = vmul.f32 %v329, 0.7978846
  %v362 = vmul.f32 %v330, 0.7978846
  %v363 = vmul.f32 %v331, 0.7978846
  %v364 = vmul.f32 %v332, 0.7978846
  %v365 = vmul.f32 %v333, 0.7978846
  %v366 = vmul.f32 %v334, 0.7978846
  %v367 = vmul.f32 %v335, 0.7978846
  %v368 = vmul.f32 %v336, 0.7978846
  %v369 = vmul.f32 %v337, 0.7978846
  %v370 = vmul.f32 %v338, 0.7978846
  %v371 = vmul.f32 %v339, 0.7978846
  %v372 = vmul.f32 %v340, 0.7978846
  %v373 = vmul.f32 %v341, 0.7978846
  %v374 = vmul.f32 %v342, 0.7978846
  %v375 = vmul.f32 %v343, 0.7978846
  %v376 = vmul.f32 %v344, 0.7978846
  %v377 = vmul.f32 %v345, 0.7978846
  %v378 = vmul.f32 %v346, 0.7978846
  %v379 = vmul.f32 %v347, 0.7978846
  %v380 = vmul.f32 %v348, 0.7978846
  %v381 = vmul.f32 %v349, 0.7978846
  %v382 = vmul.f32 %v350, 0.7978846
  %v383 = vmul.f32 %v351, 0.7978846
  %v384 = vmul.f32 %v352, 0.7978846
  %v385 = vmul.f32 %v353, 0.7978846
  %v386 = vmul.f32 %v354, 0.7978846
  %v387 = vmul.f32 %v355, 0.7978846
  %v388 = vmul.f32 %v356, 0.7978846
  %v389 = vtanh.pop %v357
  %v390 = vtanh.pop %v358
  %v391 = vtanh.pop %v359
  %v392 = vtanh.pop %v360
  %v393 = vtanh.pop %v361
  %v394 = vtanh.pop %v362
  %v395 = vtanh.pop %v363
  %v396 = vtanh.pop %v364
  %v397 = vtanh.pop %v365
  %v398 = vtanh.pop %v366
  %v399 = vtanh.pop %v367
  %v400 = vtanh.pop %v368
  %v401 = vtanh.pop %v369
  %v402 = vtanh.pop %v370
  %v403 = vtanh.pop %v371
  %v404 = vtanh.pop %v372
  %v405 = vtanh.pop %v373
  %v406 = vtanh.pop %v374
  %v407 = vtanh.pop %v375
  %v408 = vtanh.pop %v376
  %v409 = vtanh.pop %v377
  %v410 = vtanh.pop %v378
  %v411 = vtanh.pop %v379
  %v412 = vtanh.pop %v380
  %v413 = vtanh.pop %v381
  %v414 = vtanh.pop %v382
  %v415 = vtanh.pop %v383
  %v416 = vtanh.pop %v384
  %v417 = vtanh.pop %v385
  %v418 = vtanh.pop %v386
  %v419 = vtanh.pop %v387
  %v420 = vtanh.pop %v388
  %v421 = vadd.f32 %v389, 1.0
  %v422 = vadd.f32 %v390, 1.0
  %v423 = vadd.f32 %v391, 1.0
  %v424 = vadd.f32 %v392, 1.0
  %v425 = vadd.f32 %v393, 1.0
  %v426 = vadd.f32 %v394, 1.0
  %v427 = vadd.f32 %v395, 1.0
  %v428 = vadd.f32 %v396, 1.0
  %v429 = vadd.f32 %v397, 1.0
  %v430 = vadd.f32 %v398, 1.0
  %v431 = vadd.f32 %v399, 1.0
  %v432 = vadd.f32 %v400, 1.0
  %v433 = vadd.f32 %v401, 1.0
  %v434 = vadd.f32 %v402, 1.0
  %v435 = vadd.f32 %v403, 1.0
  %v436 = vadd.f32 %v404, 1.0
  %v437 = vadd.f32 %v405, 1.0
  %v438 = vadd.f32 %v406, 1.0
  %v439 = vadd.f32 %v407, 1.0
  %v440 = vadd.f32 %v408, 1.0
  %v441 = vadd.f32 %v409, 1.0
  %v442 = vadd.f32 %v410, 1.0
  %v443 = vadd.f32 %v411, 1.0
  %v444 = vadd.f32 %v412, 1.0
  %v445 = vadd.f32 %v413, 1.0
  %v446 = vadd.f32 %v414, 1.0
  %v447 = vadd.f32 %v415, 1.0
  %v448 = vadd.f32 %v416, 1.0
  %v449 = vadd.f32 %v417, 1.0
  %v450 = vadd.f32 %v418, 1.0
  %v451 = vadd.f32 %v419, 1.0
  %v452 = vadd.f32 %v420, 1.0
  %v453 = vmul.f32 %v421, 0.5
  %v454 = vmul.f32 %v422, 0.5
  %v455 = vmul.f32 %v423, 0.5
  %v456 = vmul.f32 %v424, 0.5
  %v457 = vmul.f32 %v425, 0.5
  %v458 = vmul.f32 %v426, 0.5
  %v459 = vmul.f32 %v427, 0.5
  %v460 = vmul.f32 %v428, 0.5
  %v461 = vmul.f32 %v429, 0.5
  %v462 = vmul.f32 %v430, 0.5
  %v463 = vmul.f32 %v431, 0.5
  %v464 = vmul.f32 %v432, 0.5
  %v465 = vmul.f32 %v433, 0.5
  %v466 = vmul.f32 %v434, 0.5
  %v467 = vmul.f32 %v435, 0.5
  %v468 = vmul.f32 %v436, 0.5
  %v469 = vmul.f32 %v437, 0.5
  %v470 = vmul.f32 %v438, 0.5
  %v471 = vmul.f32 %v439, 0.5
  %v472 = vmul.f32 %v440, 0.5
  %v473 = vmul.f32 %v441, 0.5
  %v474 = vmul.f32 %v442, 0.5
  %v475 = vmul.f32 %v443, 0.5
  %v476 = vmul.f32 %v444, 0.5
  %v477 = vmul.f32 %v445, 0.5
  %v478 = vmul.f32 %v446, 0.5
  %v479 = vmul.f32 %v447, 0.5
  %v480 = vmul.f32 %v448, 0.5
  %v481 = vmul.f32 %v449, 0.5
  %v482 = vmul.f32 %v450, 0.5
  %v483 = vmul.f32 %v451, 0.5
  %v484 = vmul.f32 %v452, 0.5
  %v485 = vmul.f32 %v150, %v453
  %v486 = vmul.f32 %v152, %v454
  %v487 = vmul.f32 %v155, %v455
  %v488 = vmul.f32 %v157, %v456
  %v489 = vmul.f32 %v160, %v457
  %v490 = vmul.f32 %v162, %v458
  %v491 = vmul.f32 %v165, %v459
  %v492 = vmul.f32 %v167, %v460
  %v493 = vmul.f32 %v170, %v461
  %v494 = vmul.f32 %v172, %v462
  %v495 = vmul.f32 %v175, %v463
  %v496 = vmul.f32 %v177, %v464
  %v497 = vmul.f32 %v180, %v465
  %v498 = vmul.f32 %v182, %v466
  %v499 = vmul.f32 %v185, %v467
  %v500 = vmul.f32 %v187, %v468
  %v501 = vmul.f32 %v190, %v469
  %v502 = vmul.f32 %v192, %v470
  %v503 = vmul.f32 %v195, %v471
  %v504 = vmul.f32 %v197, %v472
  %v505 = vmul.f32 %v200, %v473
  %v506 = vmul.f32 %v202, %v474
  %v507 = vmul.f32 %v205, %v475
  %v508 = vmul.f32 %v207, %v476
  %v509 = vmul.f32 %v210, %v477
  %v510 = vmul.f32 %v212, %v478
  %v511 = vmul.f32 %v215, %v479
  %v512 = vmul.f32 %v217, %v480
  %v513 = vmul.f32 %v220, %v481
  %v514 = vmul.f32 %v222, %v482
  %v515 = vmul.f32 %v225, %v483
  %v516 = vmul.f32 %v227, %v484
  %517 = vst [vmem:[%s3] sm:$0xff] %v485
  %518 = vst [vmem:[%s3 + $0x8] sm:$0xff] %v486
  %519 = vst [vmem:[%s3 + $0x10] sm:$0xff] %v487
  %520 = vst [vmem:[%s3 + $0x18] sm:$0xff] %v488
  %521 = vst [vmem:[%s3 + $0x20] sm:$0xff] %v489
  %522 = vst [vmem:[%s3 + $0x28] sm:$0xff] %v490
  %523 = vst [vmem:[%s3 + $0x30] sm:$0xff] %v491
  %524 = vst [vmem:[%s3 + $0x38] sm:$0xff] %v492
  %525 = vst [vmem:[%s3 + $0x40] sm:$0xff] %v493
  %526 = vst [vmem:[%s3 + $0x48] sm:$0xff] %v494
  %527 = vst [vmem:[%s3 + $0x50] sm:$0xff] %v495
  %528 = vst [vmem:[%s3 + $0x58] sm:$0xff] %v496
  %529 = vst [vmem:[%s3 + $0x60] sm:$0xff] %v497
  %530 = vst [vmem:[%s3 + $0x68] sm:$0xff] %v498
  %531 = vst [vmem:[%s3 + $0x70] sm:$0xff] %v499
  %532 = vst [vmem:[%s3 + $0x78] sm:$0xff] %v500
  %533 = vst [vmem:[%s3 + $0x80] sm:$0xff] %v501
  %534 = vst [vmem:[%s3 + $0x88] sm:$0xff] %v502
  %535 = vst [vmem:[%s3 + $0x90] sm:$0xff] %v503
  %536 = vst [vmem:[%s3 + $0x98] sm:$0xff] %v504
  %537 = vst [vmem:[%s3 + $0xa0] sm:$0xff] %v505
  %538 = vst [vmem:[%s3 + $0xa8] sm:$0xff] %v506
  %539 = vst [vmem:[%s3 + $0xb0] sm:$0xff] %v507
  %540 = vst [vmem:[%s3 + $0xb8] sm:$0xff] %v508
  %541 = vst [vmem:[%s3 + $0xc0] sm:$0xff] %v509
  %542 = vst [vmem:[%s3 + $0xc8] sm:$0xff] %v510
  %543 = vst [vmem:[%s3 + $0xd0] sm:$0xff] %v511
  %544 = vst [vmem:[%s3 + $0xd8] sm:$0xff] %v512
  %545 = vst [vmem:[%s3 + $0xe0] sm:$0xff] %v513
  %546 = vst [vmem:[%s3 + $0xe8] sm:$0xff] %v514
  %547 = vst [vmem:[%s3 + $0xf0] sm:$0xff] %v515
  %548 = vst [vmem:[%s3 + $0xf8] sm:$0xff] %v516
  // Predicated region
  $region14: #{hiera_perceptual_loss_no_mse.3} parent=0 // pred_check
    _
  $region15: #{hiera_perceptual_loss_no_mse.3} parent=0 // pred_check_branch
    %550 = sbr.rel (0) target = $region17
  $region16: #{hiera_perceptual_loss_no_mse.3} parent=0 // pred_region
    _
  $region17: #{hiera_perceptual_loss_no_mse.3} parent=0 // pred_fallthru
    _
  // Predicated region
  $region18: #{hiera_perceptual_loss_no_mse.3} parent=0 // pred_check
    _
  $region19: #{hiera_perceptual_loss_no_mse.3} parent=0 // pred_check_branch
    %552 = sbr.rel (0) target = $region21
  $region20: #{hiera_perceptual_loss_no_mse.3} parent=0 // pred_region
    _
  $region21: #{hiera_perceptual_loss_no_mse.3} parent=0 // pred_fallthru
    _

// kernel: hiera_perceptual_loss_no_mse.4
$region0: #{hiera_perceptual_loss_no_mse.4}
  #allocation0 [shape = 'u32[]', space=smem, size = 0x4, offset = 0x4, fixed_abs, tag = 'smem constant byte address 0x4 - core index']
  #allocation1 [shape = 'u32[72,128]{1,0:T(1,128)}', space=vmem, size = 0x9000, scoped, tag = 'internal scratch']
  %s0 = inlined_call_operand.vmem [shape: f32[64,128], index: 0, kind: input, shape index: {}]
  %s1 = inlined_call_operand.vmem [shape: bf16[128,128], index: 1, kind: input, shape index: {}]
  %s2 = inlined_call_operand.vmem [shape: f32[1,128], index: 2, kind: input, shape index: {}]
  %s3 = inlined_call_operand.vmem [shape: f32[64,128], index: 3, kind: output, shape index: {}]
  %s4 = sld [smem:[#allocation0]]
  $region22: #{hiera_perceptual_loss_no_mse.4} parent=0
    _
  %s6 = ssub.s32 1, %s4
  %s7 = scalar_select 0, %s6, %s4
  // Predicated region
  $region2: #{hiera_perceptual_loss_no_mse.4} parent=0 // pred_check
    _
  $region3: #{hiera_perceptual_loss_no_mse.4} parent=0 // pred_check_branch
    %9 = sbr.rel (0) target = $region5
  $region4: #{hiera_perceptual_loss_no_mse.4} parent=0 // pred_region
    _
  $region5: #{hiera_perceptual_loss_no_mse.4} parent=0 // pred_fallthru
    _
  // Predicated region
  $region6: #{hiera_perceptual_loss_no_mse.4} parent=0 // pred_check
    _
  $region7: #{hiera_perceptual_loss_no_mse.4} parent=0 // pred_check_branch
    %11 = sbr.rel (0) target = $region9
  $region8: #{hiera_perceptual_loss_no_mse.4} parent=0 // pred_region
    _
  $region9: #{hiera_perceptual_loss_no_mse.4} parent=0 // pred_fallthru
    _
  // Predicated region
  $region10: #{hiera_perceptual_loss_no_mse.4} parent=0 // pred_check
    _
  $region11: #{hiera_perceptual_loss_no_mse.4} parent=0 // pred_check_branch
    %13 = sbr.rel (0) target = $region13
  $region12: #{hiera_perceptual_loss_no_mse.4} parent=0 // pred_region
    _
  $region13: #{hiera_perceptual_loss_no_mse.4} parent=0 // pred_fallthru
    _
  %v14 = vld [vmem:[%s0] sm:$0xff]
  %v15 = vld [vmem:[%s0 + $0x8] sm:$0xff]
  %v16 = vld [vmem:[%s0 + $0x10] sm:$0xff]
  %v17 = vld [vmem:[%s0 + $0x18] sm:$0xff]
  %v18 = vld [vmem:[%s0 + $0x20] sm:$0xff]
  %v19 = vld [vmem:[%s0 + $0x28] sm:$0xff]
  %v20 = vld [vmem:[%s0 + $0x30] sm:$0xff]
  %v21 = vld [vmem:[%s0 + $0x38] sm:$0xff]
  %v22 = vpack.c.bf16 %v15, %v14
  %v23 = vpack.c.bf16 %v17, %v16
  %v24 = vpack.c.bf16 %v19, %v18
  %v25 = vpack.c.bf16 %v21, %v20
  %v26 = vld [vmem:[%s1] sm:$0xf]
  %v27 = vld [vmem:[%s1 + $0x4] sm:$0xf]
  %v28 = vld [vmem:[%s1 + $0x8] sm:$0xf]
  %v29 = vld [vmem:[%s1 + $0xc] sm:$0xf]
  %v30 = vld [vmem:[%s1 + $0x10] sm:$0xf]
  %v31 = vld [vmem:[%s1 + $0x14] sm:$0xf]
  %v32 = vld [vmem:[%s1 + $0x18] sm:$0xf]
  %v33 = vld [vmem:[%s1 + $0x1c] sm:$0xf]
  %v34 = vld [vmem:[%s1 + $0x20] sm:$0xf]
  %v35 = vld [vmem:[%s1 + $0x24] sm:$0xf]
  %v36 = vld [vmem:[%s1 + $0x28] sm:$0xf]
  %v37 = vld [vmem:[%s1 + $0x2c] sm:$0xf]
  %v38 = vld [vmem:[%s1 + $0x30] sm:$0xf]
  %v39 = vld [vmem:[%s1 + $0x34] sm:$0xf]
  %v40 = vld [vmem:[%s1 + $0x38] sm:$0xf]
  %v41 = vld [vmem:[%s1 + $0x3c] sm:$0xf]
  %v42 = vld [vmem:[%s2] sm:$0x1]
  %v44 = vperm.slane %v42, 0
  %v62 = vunpack.c.l.b16 %v26
  %v63 = vunpack.c.l.b16 %v27
  %v64 = vunpack.c.l.b16 %v28
  %v65 = vunpack.c.l.b16 %v29
  %v66 = vunpack.c.l.b16 %v30
  %v67 = vunpack.c.l.b16 %v31
  %v68 = vunpack.c.l.b16 %v32
  %v69 = vunpack.c.l.b16 %v33
  %v70 = vunpack.c.l.b16 %v34
  %v71 = vunpack.c.l.b16 %v35
  %v72 = vunpack.c.l.b16 %v36
  %v73 = vunpack.c.l.b16 %v37
  %v74 = vunpack.c.l.b16 %v38
  %v75 = vunpack.c.l.b16 %v39
  %v76 = vunpack.c.l.b16 %v40
  %v77 = vunpack.c.l.b16 %v41
  %v78 = vpack.c.b16 %v63, %v62
  %v79 = vpack.c.b16 %v65, %v64
  %v80 = vpack.c.b16 %v67, %v66
  %v81 = vpack.c.b16 %v69, %v68
  %v82 = vpack.c.b16 %v71, %v70
  %v83 = vpack.c.b16 %v73, %v72
  %v84 = vpack.c.b16 %v75, %v74
  %v85 = vpack.c.b16 %v77, %v76
  %94 = vmatpush.bf16.msra.mxu0 %v85
  %95 = vmatpush.bf16.msra.mxu0 %v84
  %96 = vmatpush.bf16.msra.mxu0 %v83
  %97 = vmatpush.bf16.msra.mxu0 %v82
  %98 = vmatpush.bf16.msra.mxu0 %v81
  %99 = vmatpush.bf16.msra.mxu0 %v80
  %100 = vmatpush.bf16.msra.mxu0 %v79
  %101 = vmatpush.bf16.msra.mxu0 %v78
  %102 = vmatmul.bf16.gmra.mxu0 %v22
  %v103 = vpop.f32.mrf.mxu0
  %v104 = vadd.f32 %v44, %v103
  %v105 = vpop.f32.mrf.mxu0
  %v106 = vadd.f32 %v44, %v105
  %107 = vmatmul.bf16.gmra.mxu0 %v23
  %v108 = vpop.f32.mrf.mxu0
  %v109 = vadd.f32 %v44, %v108
  %v110 = vpop.f32.mrf.mxu0
  %v111 = vadd.f32 %v44, %v110
  %112 = vmatmul.bf16.gmra.mxu0 %v24
  %v113 = vpop.f32.mrf.mxu0
  %v114 = vadd.f32 %v44, %v113
  %v115 = vpop.f32.mrf.mxu0
  %v116 = vadd.f32 %v44, %v115
  %117 = vmatmul.bf16.gmra.mxu0 %v25
  %v118 = vpop.f32.mrf.mxu0
  %v119 = vadd.f32 %v44, %v118
  %v120 = vpop.f32.mrf.mxu0
  %v121 = vadd.f32 %v44, %v120
  %122 = vdwg.mxu0
  %v123 = vmul.f32 %v104, %v104
  %v124 = vmul.f32 %v106, %v106
  %v125 = vmul.f32 %v109, %v109
  %v126 = vmul.f32 %v111, %v111
  %v127 = vmul.f32 %v114, %v114
  %v128 = vmul.f32 %v116, %v116
  %v129 = vmul.f32 %v119, %v119
  %v130 = vmul.f32 %v121, %v121
  %v131 = vmul.f32 %v104, %v123
  %v132 = vmul.f32 %v106, %v124
  %v133 = vmul.f32 %v109, %v125
  %v134 = vmul.f32 %v111, %v126
  %v135 = vmul.f32 %v114, %v127
  %v136 = vmul.f32 %v116, %v128
  %v137 = vmul.f32 %v119, %v129
  %v138 = vmul.f32 %v121, %v130
  %v139 = vmul.f32 %v131, 0.044715
  %v140 = vmul.f32 %v132, 0.044715
  %v141 = vmul.f32 %v133, 0.044715
  %v142 = vmul.f32 %v134, 0.044715
  %v143 = vmul.f32 %v135, 0.044715
  %v144 = vmul.f32 %v136, 0.044715
  %v145 = vmul.f32 %v137, 0.044715
  %v146 = vmul.f32 %v138, 0.044715
  %v147 = vadd.f32 %v104, %v139
  %v148 = vadd.f32 %v106, %v140
  %v149 = vadd.f32 %v109, %v141
  %v150 = vadd.f32 %v111, %v142
  %v151 = vadd.f32 %v114, %v143
  %v152 = vadd.f32 %v116, %v144
  %v153 = vadd.f32 %v119, %v145
  %v154 = vadd.f32 %v121, %v146
  %v155 = vmul.f32 %v147, 0.7978846
  %v156 = vmul.f32 %v148, 0.7978846
  %v157 = vmul.f32 %v149, 0.7978846
  %v158 = vmul.f32 %v150, 0.7978846
  %v159 = vmul.f32 %v151, 0.7978846
  %v160 = vmul.f32 %v152, 0.7978846
  %v161 = vmul.f32 %v153, 0.7978846
  %v162 = vmul.f32 %v154, 0.7978846
  %v163 = vtanh.pop %v155
  %v164 = vtanh.pop %v156
  %v165 = vtanh.pop %v157
  %v166 = vtanh.pop %v158
  %v167 = vtanh.pop %v159
  %v168 = vtanh.pop %v160
  %v169 = vtanh.pop %v161
  %v170 = vtanh.pop %v162
  %v171 = vadd.f32 %v163, 1.0
  %v172 = vadd.f32 %v164, 1.0
  %v173 = vadd.f32 %v165, 1.0
  %v174 = vadd.f32 %v166, 1.0
  %v175 = vadd.f32 %v167, 1.0
  %v176 = vadd.f32 %v168, 1.0
  %v177 = vadd.f32 %v169, 1.0
  %v178 = vadd.f32 %v170, 1.0
  %v179 = vmul.f32 %v171, 0.5
  %v180 = vmul.f32 %v172, 0.5
  %v181 = vmul.f32 %v173, 0.5
  %v182 = vmul.f32 %v174, 0.5
  %v183 = vmul.f32 %v175, 0.5
  %v184 = vmul.f32 %v176, 0.5
  %v185 = vmul.f32 %v177, 0.5
  %v186 = vmul.f32 %v178, 0.5
  %v187 = vmul.f32 %v104, %v179
  %v188 = vmul.f32 %v106, %v180
  %v189 = vmul.f32 %v109, %v181
  %v190 = vmul.f32 %v111, %v182
  %v191 = vmul.f32 %v114, %v183
  %v192 = vmul.f32 %v116, %v184
  %v193 = vmul.f32 %v119, %v185
  %v194 = vmul.f32 %v121, %v186
  %195 = vst [vmem:[%s3] sm:$0xff] %v187
  %196 = vst [vmem:[%s3 + $0x8] sm:$0xff] %v188
  %197 = vst [vmem:[%s3 + $0x10] sm:$0xff] %v189
  %198 = vst [vmem:[%s3 + $0x18] sm:$0xff] %v190
  %199 = vst [vmem:[%s3 + $0x20] sm:$0xff] %v191
  %200 = vst [vmem:[%s3 + $0x28] sm:$0xff] %v192
  %201 = vst [vmem:[%s3 + $0x30] sm:$0xff] %v193
  %202 = vst [vmem:[%s3 + $0x38] sm:$0xff] %v194
  // Predicated region
  $region14: #{hiera_perceptual_loss_no_mse.4} parent=0 // pred_check
    _
  $region15: #{hiera_perceptual_loss_no_mse.4} parent=0 // pred_check_branch
    %204 = sbr.rel (0) target = $region17
  $region16: #{hiera_perceptual_loss_no_mse.4} parent=0 // pred_region
    _
  $region17: #{hiera_perceptual_loss_no_mse.4} parent=0 // pred_fallthru
    _
  // Predicated region
  $region18: #{hiera_perceptual_loss_no_mse.4} parent=0 // pred_check
    _
  $region19: #{hiera_perceptual_loss_no_mse.4} parent=0 // pred_check_branch
    %206 = sbr.rel (0) target = $region21
  $region20: #{hiera_perceptual_loss_no_mse.4} parent=0 // pred_region
    _
  $region21: #{hiera_perceptual_loss_no_mse.4} parent=0 // pred_fallthru
    _

// kernel: hiera_perceptual_loss_no_mse.5
$region0: #{hiera_perceptual_loss_no_mse.5}
  #allocation0 [shape = 'u32[]', space=smem, size = 0x4, offset = 0x4, fixed_abs, tag = 'smem constant byte address 0x4 - core index']
  #allocation1 [shape = 'u32[72,128]{1,0:T(1,128)}', space=vmem, size = 0x9000, scoped, tag = 'internal scratch']
  #allocation2 [shape = 'f32[16,64]{1,0:T(8,128)}', space=vmem, size = 0x2000, scoped, tag = 'scratch operand']
  #allocation3 [shape = 'f32[16,64]{1,0:T(8,128)}', space=vmem, size = 0x2000, scoped, tag = 'scratch operand']
  %s0 = inlined_call_operand.vmem [shape: f32[64,64], index: 0, kind: input, shape index: {}]
  %s1 = inlined_call_operand.vmem [shape: f32[32,32], index: 1, kind: input, shape index: {}]
  %s2 = inlined_call_operand.vmem [shape: f32[32,32], index: 2, kind: input, shape index: {}]
  %s3 = inlined_call_operand.vmem [shape: f32[64,64], index: 3, kind: input, shape index: {}]
  %s4 = inlined_call_operand.vmem [shape: f32[64,64], index: 4, kind: input, shape index: {}]
  %s5 = inlined_call_operand.vmem [shape: f32[2,1,1], index: 5, kind: output, shape index: {0}]
  %s6 = inlined_call_operand.vmem [shape: f32[2,1,1], index: 6, kind: output, shape index: {1}]
  %7 = xla_tuple %s5, %s6
  %s8 = sld [smem:[#allocation0]]
  $region69: #{hiera_perceptual_loss_no_mse.5} parent=0
    _
  %s10 = ssub.s32 1, %s8
  %s11 = scalar_select 0, %s10, %s8
  loop: start=0, step=1, limit=4
  $region2: #{hiera_perceptual_loss_no_mse.5} parent=0 // loop_pre_header
    _
  $region3: #{hiera_perceptual_loss_no_mse.5} parent=0 // loop_header
    %s13 = sphi 0, %s17
    %p14 = scmp.ge.s32.totalorder %s13, 4
    %s20 = sphi 0, %s32
    %s21 = sphi 0, %s28
    %s22 = sphi 0, %s20
    %s23 = sphi 0, %s21
    %s24 = sphi 0, %s22
    %s25 = sphi 0, %s23
    %s37 = sphi 0, %s39
    %s40 = sphi 0, %s37
    %s41 = sphi 0, %s40
    %s57 = sphi 0, %s41
    %s61 = sphi 0, %s61
    %s63 = sphi 0, %s61
    %s64 = sphi 0, %s63
    %s78 = sphi 0, %s64
    %s82 = sphi 0, %s82
    %s84 = sphi 0, %s82
    %s85 = sphi 0, %s84
    %s99 = sphi 0, %s85
    %s103 = sphi 0, %s103
    %s105 = sphi 0, %s103
    %s106 = sphi 0, %s105
    %s120 = sphi 0, %s106
    %s124 = sphi 0, %s124
    %s126 = sphi 0, %s124
    %s127 = sphi 0, %s126
    %s141 = sphi 0, %s127
    %s147 = sphi 0, %s149
    %s150 = sphi 0, %s147
    %s151 = sphi 0, %s150
    %s167 = sphi 0, %s151
    %s173 = sphi 0, %s175
    %s176 = sphi 0, %s173
    %s177 = sphi 0, %s176
    %s193 = sphi 0, %s177
  $region4: #{hiera_perceptual_loss_no_mse.5} parent=0 // loop_header_branch
    %16 = sbr.rel (%p14) target = $region8
  $region5: #{hiera_perceptual_loss_no_mse.5} parent=0 // loop_body
    %s18 = ssub.s32 %s13, 1
    %s19 = ssub.s32 %s13, 2
    %s26 = sadd.s32 1, %s21
    %p27 = scmp.ge.s32.totalorder %s26, 1
    %s28 = scalar_select %p27, 0, %s26
    %s29 = sadd.s32 1, %s20
    %s30 = scalar_select %p27, %s29, %s20
    %p31 = scmp.ge.s32.totalorder %s30, 2
    %s32 = scalar_select %p31, 0, %s30
    %s33 = sadd.s32 %s20, %s21
    %s34 = sadd.s32 %s32, %s28
    %s35 = ssub.s32 %s33, %s34
    %p36 = scmp.eq.s32.totalorder %s35, 0
    %s38 = sadd.s32 %s37, 1
    %s39 = scalar_select %p36, %s37, %s38
    %p42 = pneg %p36
    %p43 = scmp.eq.s32.totalorder %s13, 1
    %p44 = por %p42, %p43
    %p45 = scmp.ne.s32.totalorder %s37, %s40
    %p46 = scmp.eq.s32.totalorder %s13, 0
    %p47 = por %p45, %p46
    %p48 = scmp.ne.s32.totalorder %s37, %s40
    %p49 = scmp.eq.s32.totalorder %s18, 1
    %p50 = por %p48, %p49
    %p51 = scmp.ne.s32.totalorder %s40, %s41
    %p52 = scmp.eq.s32.totalorder %s18, 0
    %p53 = por %p51, %p52
    %p54 = scmp.ne.s32.totalorder %s40, %s41
    %p55 = scmp.eq.s32.totalorder %s19, 1
    %p56 = por %p54, %p55
    %p58 = scmp.ne.s32.totalorder %s41, %s57
    %p59 = scmp.eq.s32.totalorder %s19, 0
    %p60 = por %p58, %p59
    %s62 = sadd.s32 %s61, 1
    %p65 = scmp.eq.s32.totalorder %s13, 1
    %p66 = scmp.ne.s32.totalorder %s61, %s63
    %p67 = scmp.eq.s32.totalorder %s13, 0
    %p68 = por %p66, %p67
    %p69 = scmp.ne.s32.totalorder %s61, %s63
    %p70 = scmp.eq.s32.totalorder %s18, 1
    %p71 = por %p69, %p70
    %p72 = scmp.ne.s32.totalorder %s63, %s64
    %p73 = scmp.eq.s32.totalorder %s18, 0
    %p74 = por %p72, %p73
    %p75 = scmp.ne.s32.totalorder %s63, %s64
    %p76 = scmp.eq.s32.totalorder %s19, 1
    %p77 = por %p75, %p76
    %p79 = scmp.ne.s32.totalorder %s64, %s78
    %p80 = scmp.eq.s32.totalorder %s19, 0
    %p81 = por %p79, %p80
    %s83 = sadd.s32 %s82, 1
    %p86 = scmp.eq.s32.totalorder %s13, 1
    %p87 = scmp.ne.s32.totalorder %s82, %s84
    %p88 = scmp.eq.s32.totalorder %s13, 0
    %p89 = por %p87, %p88
    %p90 = scmp.ne.s32.totalorder %s82, %s84
    %p91 = scmp.eq.s32.totalorder %s18, 1
    %p92 = por %p90, %p91
    %p93 = scmp.ne.s32.totalorder %s84, %s85
    %p94 = scmp.eq.s32.totalorder %s18, 0
    %p95 = por %p93, %p94
    %p96 = scmp.ne.s32.totalorder %s84, %s85
    %p97 = scmp.eq.s32.totalorder %s19, 1
    %p98 = por %p96, %p97
    %p100 = scmp.ne.s32.totalorder %s85, %s99
    %p101 = scmp.eq.s32.totalorder %s19, 0
    %p102 = por %p100, %p101
    %s104 = sadd.s32 %s103, 1
    %p107 = scmp.eq.s32.totalorder %s13, 1
    %p108 = scmp.ne.s32.totalorder %s103, %s105
    %p109 = scmp.eq.s32.totalorder %s13, 0
    %p110 = por %p108, %p109
    %p111 = scmp.ne.s32.totalorder %s103, %s105
    %p112 = scmp.eq.s32.totalorder %s18, 1
    %p113 = por %p111, %p112
    %p114 = scmp.ne.s32.totalorder %s105, %s106
    %p115 = scmp.eq.s32.totalorder %s18, 0
    %p116 = por %p114, %p115
    %p117 = scmp.ne.s32.totalorder %s105, %s106
    %p118 = scmp.eq.s32.totalorder %s19, 1
    %p119 = por %p117, %p118
    %p121 = scmp.ne.s32.totalorder %s106, %s120
    %p122 = scmp.eq.s32.totalorder %s19, 0
    %p123 = por %p121, %p122
    %s125 = sadd.s32 %s124, 1
    %p128 = scmp.eq.s32.totalorder %s13, 1
    %p129 = scmp.ne.s32.totalorder %s124, %s126
    %p130 = scmp.eq.s32.totalorder %s13, 0
    %p131 = por %p129, %p130
    %p132 = scmp.ne.s32.totalorder %s124, %s126
    %p133 = scmp.eq.s32.totalorder %s18, 1
    %p134 = por %p132, %p133
    %p135 = scmp.ne.s32.totalorder %s126, %s127
    %p136 = scmp.eq.s32.totalorder %s18, 0
    %p137 = por %p135, %p136
    %p138 = scmp.ne.s32.totalorder %s126, %s127
    %p139 = scmp.eq.s32.totalorder %s19, 1
    %p140 = por %p138, %p139
    %p142 = scmp.ne.s32.totalorder %s127, %s141
    %p143 = scmp.eq.s32.totalorder %s19, 0
    %p144 = por %p142, %p143
    %s145 = ssub.s32 %s20, %s32
    %p146 = scmp.eq.s32.totalorder %s145, 0
    %s148 = sadd.s32 %s147, 1
    %s149 = scalar_select %p146, %s147, %s148
    %p152 = pneg %p146
    %p153 = scmp.eq.s32.totalorder %s13, 1
    %p154 = por %p152, %p153
    %p155 = scmp.ne.s32.totalorder %s147, %s150
    %p156 = scmp.eq.s32.totalorder %s13, 0
    %p157 = por %p155, %p156
    %p158 = scmp.ne.s32.totalorder %s147, %s150
    %p159 = scmp.eq.s32.totalorder %s18, 1
    %p160 = por %p158, %p159
    %p161 = scmp.ne.s32.totalorder %s150, %s151
    %p162 = scmp.eq.s32.totalorder %s18, 0
    %p163 = por %p161, %p162
    %p164 = scmp.ne.s32.totalorder %s150, %s151
    %p165 = scmp.eq.s32.totalorder %s19, 1
    %p166 = por %p164, %p165
    %p168 = scmp.ne.s32.totalorder %s151, %s167
    %p169 = scmp.eq.s32.totalorder %s19, 0
    %p170 = por %p168, %p169
    %s171 = ssub.s32 %s20, %s32
    %p172 = scmp.eq.s32.totalorder %s171, 0
    %s174 = sadd.s32 %s173, 1
    %s175 = scalar_select %p172, %s173, %s174
    %p178 = pneg %p172
    %p179 = scmp.eq.s32.totalorder %s13, 1
    %p180 = por %p178, %p179
    %p181 = scmp.ne.s32.totalorder %s173, %s176
    %p182 = scmp.eq.s32.totalorder %s13, 0
    %p183 = por %p181, %p182
    %p184 = scmp.ne.s32.totalorder %s173, %s176
    %p185 = scmp.eq.s32.totalorder %s18, 1
    %p186 = por %p184, %p185
    %p187 = scmp.ne.s32.totalorder %s176, %s177
    %p188 = scmp.eq.s32.totalorder %s18, 0
    %p189 = por %p187, %p188
    %p190 = scmp.ne.s32.totalorder %s176, %s177
    %p191 = scmp.eq.s32.totalorder %s19, 1
    %p192 = por %p190, %p191
    %p194 = scmp.ne.s32.totalorder %s177, %s193
    %p195 = scmp.eq.s32.totalorder %s19, 0
    %p196 = por %p194, %p195
    %p197 = scmp.le.s32.totalorder 1, %s13
    %p198 = scmp.lt.s32.totalorder %s13, 3
    %p199 = pnand %p197, %p198
    %p200 = pneg %p199
    // Predicated region
    $region9: #{hiera_perceptual_loss_no_mse.5} parent=5 // pred_check
      _
    $region10: #{hiera_perceptual_loss_no_mse.5} parent=5 // pred_check_branch
      %202 = sbr.rel (%p199) target = $region12
    $region11: #{hiera_perceptual_loss_no_mse.5} parent=5 // pred_region
      %s203 = ssub.s32 %s13, 1
      // Predicated region
      $region13: #{hiera_perceptual_loss_no_mse.5} parent=11 // pred_check
        %p204 = pneg %p74
      $region14: #{hiera_perceptual_loss_no_mse.5} parent=11 // pred_check_branch
        %206 = sbr.rel (%p204) target = $region16
      $region15: #{hiera_perceptual_loss_no_mse.5} parent=11 // pred_region
        _
      $region16: #{hiera_perceptual_loss_no_mse.5} parent=11 // pred_fallthru
        _
      // Predicated region
      $region17: #{hiera_perceptual_loss_no_mse.5} parent=11 // pred_check
        %p207 = pneg %p95
      $region18: #{hiera_perceptual_loss_no_mse.5} parent=11 // pred_check_branch
        %209 = sbr.rel (%p207) target = $region20
      $region19: #{hiera_perceptual_loss_no_mse.5} parent=11 // pred_region
        _
      $region20: #{hiera_perceptual_loss_no_mse.5} parent=11 // pred_fallthru
        _
      // Predicated region
      $region21: #{hiera_perceptual_loss_no_mse.5} parent=11 // pred_check
        %p210 = pneg %p116
      $region22: #{hiera_perceptual_loss_no_mse.5} parent=11 // pred_check_branch
        %212 = sbr.rel (%p210) target = $region24
      $region23: #{hiera_perceptual_loss_no_mse.5} parent=11 // pred_region
        _
      $region24: #{hiera_perceptual_loss_no_mse.5} parent=11 // pred_fallthru
        _
      // Predicated region
      $region25: #{hiera_perceptual_loss_no_mse.5} parent=11 // pred_check
        %p213 = pneg %p137
      $region26: #{hiera_perceptual_loss_no_mse.5} parent=11 // pred_check_branch
        %215 = sbr.rel (%p213) target = $region28
      $region27: #{hiera_perceptual_loss_no_mse.5} parent=11 // pred_region
        _
      $region28: #{hiera_perceptual_loss_no_mse.5} parent=11 // pred_fallthru
        _
    $region12: #{hiera_perceptual_loss_no_mse.5} parent=5 // pred_fallthru
      _
    %p216 = scmp.lt.s32.totalorder %s13, 2
    // Predicated region
    $region29: #{hiera_perceptual_loss_no_mse.5} parent=5 // pred_check
      %p217 = pneg %p216
    $region30: #{hiera_perceptual_loss_no_mse.5} parent=5 // pred_check_branch
      %219 = sbr.rel (%p217) target = $region32
    $region31: #{hiera_perceptual_loss_no_mse.5} parent=5 // pred_region
      // Predicated region
      $region33: #{hiera_perceptual_loss_no_mse.5} parent=31 // pred_check
        %p220 = pneg %p47
      $region34: #{hiera_perceptual_loss_no_mse.5} parent=31 // pred_check_branch
        %222 = sbr.rel (%p220) target = $region36
      $region35: #{hiera_perceptual_loss_no_mse.5} parent=31 // pred_region
        %s223 = sadd.s32 %s20, %s21
        %s224 = smul.u32 4, %s223
        %p225 = scmp.lt.s32.totalorder %s224, 7
        %s226 = scalar_select %p225, %s224, 7
        %s227 = smul.addr %s226, 8
        %s228 = scalar_lea.vmem %s0, %s227
        %s229 = sadd.s32 %s20, %s21
        %s230 = smul.u32 4, %s229
      $region36: #{hiera_perceptual_loss_no_mse.5} parent=31 // pred_fallthru
        _
    $region32: #{hiera_perceptual_loss_no_mse.5} parent=5 // pred_fallthru
      _
    %p231 = scmp.le.s32.totalorder 1, %s13
    %p232 = scmp.lt.s32.totalorder %s13, 3
    %p233 = pnand %p231, %p232
    %p234 = pneg %p233
    // Predicated region
    $region37: #{hiera_perceptual_loss_no_mse.5} parent=5 // pred_check
      _
    $region38: #{hiera_perceptual_loss_no_mse.5} parent=5 // pred_check_branch
      %236 = sbr.rel (%p233) target = $region40
    $region39: #{hiera_perceptual_loss_no_mse.5} parent=5 // pred_region
      %s237 = ssub.s32 %s13, 1
      %s238 = sadd.s32 %s22, %s23
      %s239 = smul.u32 4, %s238
      %p240 = scmp.lt.s32.totalorder %s239, 7
      %s241 = scalar_select %p240, %s239, 7
      %s242 = smul.addr %s241, 8
      %s243 = scalar_lea.vmem %s0, %s242
      %p244 = pneg %p53
      %p245 = pneg %p50
      %p246 = pneg %p74
      %p247 = pneg %p71
      %p248 = pneg %p95
      %p249 = pneg %p92
      %p250 = pneg %p116
      %p251 = pneg %p113
      %p252 = pneg %p137
      %p253 = pneg %p134
      %p254 = pneg %p163
      %p255 = pneg %p160
      %p256 = scmp.lt.s32.totalorder %s22, 1
      %s257 = scalar_select %p256, %s22, 1
      %s258 = scalar_lea.vmem %s5, %s257
      %p259 = pneg %p189
      %p260 = pneg %p186
      %p261 = scmp.lt.s32.totalorder %s22, 1
      %s262 = scalar_select %p261, %s22, 1
      %s263 = scalar_lea.vmem %s6, %s262
      %s264 = sadd.s32 %s22, %s23
      %s265 = smul.u32 4, %s264
      %p266 = scmp.lt.s32.totalorder %s265, 7
      %s267 = scalar_select %p266, %s265, 7
      %s268 = smul.addr %s267, 8
      %s269 = scalar_lea.vmem %s0, %s268
      %s270 = sadd.s32 %s22, %s23
      %s271 = smul.u32 4, %s270
      %p272 = scmp.lt.s32.totalorder %s22, 1
      %s273 = scalar_select %p272, %s22, 1
      %s274 = scalar_lea.vmem %s5, %s273
      %p275 = scmp.lt.s32.totalorder %s22, 1
      %s276 = scalar_select %p275, %s22, 1
      %s277 = scalar_lea.vmem %s6, %s276
      %p278 = scmp.eq.s32.totalorder %s23, 0
      // Predicated region
      $region41: #{hiera_perceptual_loss_no_mse.5} parent=39 // pred_check
        %p279 = pneg %p278
      $region42: #{hiera_perceptual_loss_no_mse.5} parent=39 // pred_check_branch
        %281 = sbr.rel (%p279) target = $region44
      $region43: #{hiera_perceptual_loss_no_mse.5} parent=39 // pred_region
        %vm282 = vcmask 523264
        %283 = vst.msk [vmem:[#allocation2] sm:$0xff] %vm282, 0.0
        %284 = vst.msk [vmem:[#allocation2 + $0x8] sm:$0xff] %vm282, 0.0
        %285 = vst.msk [vmem:[#allocation3] sm:$0xff] %vm282, 0.0
        %286 = vst.msk [vmem:[#allocation3 + $0x8] sm:$0xff] %vm282, 0.0
      $region44: #{hiera_perceptual_loss_no_mse.5} parent=39 // pred_fallthru
        _
      %v287 = vld [vmem:[%s269] sm:$0xff]
      %v288 = vld [vmem:[%s269 + $0x8] sm:$0xff]
      %v289 = vld [vmem:[%s269 + $0x10] sm:$0xff]
      %v290 = vld [vmem:[%s269 + $0x18] sm:$0xff]
      %v291 = vld [vmem:[%s3] sm:$0xff]
      %v292 = vld [vmem:[%s3 + $0x8] sm:$0xff]
      %v293 = vld [vmem:[%s3 + $0x10] sm:$0xff]
      %v294 = vld [vmem:[%s3 + $0x18] sm:$0xff]
      %v295 = vld [vmem:[%s3 + $0x20] sm:$0xff]
      %v296 = vld [vmem:[%s3 + $0x28] sm:$0xff]
      %v297 = vld [vmem:[%s3 + $0x30] sm:$0xff]
      %v298 = vld [vmem:[%s3 + $0x38] sm:$0xff]
      %v299 = vld [vmem:[%s4] sm:$0xff]
      %v300 = vld [vmem:[%s4 + $0x8] sm:$0xff]
      %v301 = vld [vmem:[%s4 + $0x10] sm:$0xff]
      %v302 = vld [vmem:[%s4 + $0x18] sm:$0xff]
      %v303 = vld [vmem:[%s4 + $0x20] sm:$0xff]
      %v304 = vld [vmem:[%s4 + $0x28] sm:$0xff]
      %v305 = vld [vmem:[%s4 + $0x30] sm:$0xff]
      %v306 = vld [vmem:[%s4 + $0x38] sm:$0xff]
      %v307 = vld [vmem:[%s1] sm:$0xff]
      %v308 = vld [vmem:[%s1 + $0x8] sm:$0xff]
      %v309 = vld [vmem:[%s1 + $0x10] sm:$0xff]
      %v310 = vld [vmem:[%s1 + $0x18] sm:$0xff]
      %v311 = vld [vmem:[%s2] sm:$0xff]
      %v312 = vld [vmem:[%s2 + $0x8] sm:$0xff]
      %v313 = vld [vmem:[%s2 + $0x10] sm:$0xff]
      %v314 = vld [vmem:[%s2 + $0x18] sm:$0xff]
      %vm315 = vcmask 523264
      %v317 = vsel %vm315, %v287, 0
      %v320 = vsel %vm315, %v288, 0
      %v323 = vsel %vm315, %v289, 0
      %v326 = vsel %vm315, %v290, 0
      %328 = vmatpush.msra.mxu0 0.0
      %329 = vmatpush.msra.mxu0 0.0
      %330 = vmatpush.msra.mxu0 0.0
      %331 = vmatpush.msra.mxu0 0.0
      %332 = vmatpush.msra.mxu0 0.0
      %333 = vmatpush.msra.mxu0 0.0
      %334 = vmatpush.msra.mxu0 0.0
      %335 = vmatpush.msra.mxu0 0.0
      %336 = vmatpush.msra.mxu0 %v298
      %337 = vmatpush.msra.mxu0 %v297
      %338 = vmatpush.msra.mxu0 %v296
      %339 = vmatpush.msra.mxu0 %v295
      %340 = vmatpush.msra.mxu0 %v294
      %341 = vmatpush.msra.mxu0 %v293
      %342 = vmatpush.msra.mxu0 %v292
      %343 = vmatpush.msra.mxu0 %v291
      %344 = vmatmul.f32.gmra.mxu0 %v317
      %v345 = vpop.f32.mrf.mxu0
      %v346 = vadd.f32 0.0, %v345
      %347 = vmatmul.f32.gmra.mxu0 %v320
      %v348 = vpop.f32.mrf.mxu0
      %v349 = vadd.f32 0.0, %v348
      %350 = vmatmul.f32.gmra.mxu0 %v323
      %v351 = vpop.f32.mrf.mxu0
      %v352 = vadd.f32 0.0, %v351
      %353 = vmatmul.f32.gmra.mxu0 %v326
      %v354 = vpop.f32.mrf.mxu0
      %v355 = vadd.f32 0.0, %v354
      %356 = vdwg.mxu0
      %357 = vmatpush.msra.mxu0 0.0
      %358 = vmatpush.msra.mxu0 0.0
      %359 = vmatpush.msra.mxu0 0.0
      %360 = vmatpush.msra.mxu0 0.0
      %361 = vmatpush.msra.mxu0 0.0
      %362 = vmatpush.msra.mxu0 0.0
      %363 = vmatpush.msra.mxu0 0.0
      %364 = vmatpush.msra.mxu0 0.0
      %365 = vmatpush.msra.mxu0 %v306
      %366 = vmatpush.msra.mxu0 %v305
      %367 = vmatpush.msra.mxu0 %v304
      %368 = vmatpush.msra.mxu0 %v303
      %369 = vmatpush.msra.mxu0 %v302
      %370 = vmatpush.msra.mxu0 %v301
      %371 = vmatpush.msra.mxu0 %v300
      %372 = vmatpush.msra.mxu0 %v299
      %373 = vmatmul.f32.gmra.mxu0 %v317
      %v374 = vpop.f32.mrf.mxu0
      %v375 = vadd.f32 0.0, %v374
      %376 = vmatmul.f32.gmra.mxu0 %v320
      %v377 = vpop.f32.mrf.mxu0
      %v378 = vadd.f32 0.0, %v377
      %379 = vmatmul.f32.gmra.mxu0 %v323
      %v380 = vpop.f32.mrf.mxu0
      %v381 = vadd.f32 0.0, %v380
      %382 = vmatmul.f32.gmra.mxu0 %v326
      %v383 = vpop.f32.mrf.mxu0
      %v384 = vadd.f32 0.0, %v383
      %385 = vdwg.mxu0
      %vm386 = vcmask 261120
      %v388 = vsel %vm386, %v307, 0
      %v391 = vsel %vm386, %v308, 0
      %v394 = vsel %vm386, %v309, 0
      %v397 = vsel %vm386, %v310, 0
      %399 = vmatpush.msra.mxu0 0.0
      %400 = vmatpush.msra.mxu0 0.0
      %401 = vmatpush.msra.mxu0 0.0
      %402 = vmatpush.msra.mxu0 0.0
      %403 = vmatpush.msra.mxu0 0.0
      %404 = vmatpush.msra.mxu0 0.0
      %405 = vmatpush.msra.mxu0 0.0
      %406 = vmatpush.msra.mxu0 0.0
      %407 = vmatpush.msra.mxu0 0.0
      %408 = vmatpush.msra.mxu0 0.0
      %409 = vmatpush.msra.mxu0 0.0
      %410 = vmatpush.msra.mxu0 0.0
      %411 = vmatpush.msra.mxu0 %v355
      %412 = vmatpush.msra.mxu0 %v352
      %413 = vmatpush.msra.mxu0 %v349
      %414 = vmatpush.msra.mxu0 %v346
      %415 = vmatmul.f32.gmra.mxu0 %v388
      %v416 = vpop.f32.mrf.mxu0
      %v417 = vadd.f32 0.0, %v416
      %418 = vmatmul.f32.gmra.mxu0 %v391
      %v419 = vpop.f32.mrf.mxu0
      %v420 = vadd.f32 0.0, %v419
      %421 = vmatmul.f32.gmra.mxu0 %v394
      %v422 = vpop.f32.mrf.mxu0
      %v423 = vadd.f32 0.0, %v422
      %424 = vmatmul.f32.gmra.mxu0 %v397
      %v425 = vpop.f32.mrf.mxu0
      %v426 = vadd.f32 0.0, %v425
      %427 = vdwg.mxu0
      %v429 = vsel %vm386, %v311, 0
      %v432 = vsel %vm386, %v312, 0
      %v435 = vsel %vm386, %v313, 0
      %v438 = vsel %vm386, %v314, 0
      %440 = vmatpush.msra.mxu0 0.0
      %441 = vmatpush.msra.mxu0 0.0
      %442 = vmatpush.msra.mxu0 0.0
      %443 = vmatpush.msra.mxu0 0.0
      %444 = vmatpush.msra.mxu0 0.0
      %445 = vmatpush.msra.mxu0 0.0
      %446 = vmatpush.msra.mxu0 0.0
      %447 = vmatpush.msra.mxu0 0.0
      %448 = vmatpush.msra.mxu0 0.0
      %449 = vmatpush.msra.mxu0 0.0
      %450 = vmatpush.msra.mxu0 0.0
      %451 = vmatpush.msra.mxu0 0.0
      %452 = vmatpush.msra.mxu0 %v384
      %453 = vmatpush.msra.mxu0 %v381
      %454 = vmatpush.msra.mxu0 %v378
      %455 = vmatpush.msra.mxu0 %v375
      %456 = vmatmul.f32.gmra.mxu0 %v429
      %v457 = vpop.f32.mrf.mxu0
      %v458 = vadd.f32 0.0, %v457
      %459 = vmatmul.f32.gmra.mxu0 %v432
      %v460 = vpop.f32.mrf.mxu0
      %v461 = vadd.f32 0.0, %v460
      %462 = vmatmul.f32.gmra.mxu0 %v435
      %v463 = vpop.f32.mrf.mxu0
      %v464 = vadd.f32 0.0, %v463
      %465 = vmatmul.f32.gmra.mxu0 %v438
      %v466 = vpop.f32.mrf.mxu0
      %v467 = vadd.f32 0.0, %v466
      %468 = vdwg.mxu0
      %v469 = vsub.f32 %v417, %v458
      %v470 = vsub.f32 %v420, %v461
      %v471 = vsub.f32 %v423, %v464
      %v472 = vsub.f32 %v426, %v467
      %473 = vmatpush.msra.mxu0 0.0
      %474 = vmatpush.msra.mxu0 0.0
      %475 = vmatpush.msra.mxu0 0.0
      %476 = vmatpush.msra.mxu0 0.0
      %477 = vmatpush.msra.mxu0 0.0
      %478 = vmatpush.msra.mxu0 0.0
      %479 = vmatpush.msra.mxu0 0.0
      %480 = vmatpush.msra.mxu0 0.0
      %481 = vmatpush.msra.mxu0 0.0
      %482 = vmatpush.msra.mxu0 0.0
      %483 = vmatpush.msra.mxu0 0.0
      %484 = vmatpush.msra.mxu0 0.0
      %485 = vmatpush.msra.mxu0 %v355
      %486 = vmatpush.msra.mxu0 %v352
      %487 = vmatpush.msra.mxu0 %v349
      %488 = vmatpush.msra.mxu0 %v346
      %489 = vmatmul.f32.gmra.mxu0 %v429
      %v490 = vpop.f32.mrf.mxu0
      %v491 = vadd.f32 0.0, %v490
      %492 = vmatmul.f32.gmra.mxu0 %v432
      %v493 = vpop.f32.mrf.mxu0
      %v494 = vadd.f32 0.0, %v493
      %495 = vmatmul.f32.gmra.mxu0 %v435
      %v496 = vpop.f32.mrf.mxu0
      %v497 = vadd.f32 0.0, %v496
      %498 = vmatmul.f32.gmra.mxu0 %v438
      %v499 = vpop.f32.mrf.mxu0
      %v500 = vadd.f32 0.0, %v499
      %501 = vdwg.mxu0
      %502 = vmatpush.msra.mxu0 0.0
      %503 = vmatpush.msra.mxu0 0.0
      %504 = vmatpush.msra.mxu0 0.0
      %505 = vmatpush.msra.mxu0 0.0
      %506 = vmatpush.msra.mxu0 0.0
      %507 = vmatpush.msra.mxu0 0.0
      %508 = vmatpush.msra.mxu0 0.0
      %509 = vmatpush.msra.mxu0 0.0
      %510 = vmatpush.msra.mxu0 0.0
      %511 = vmatpush.msra.mxu0 0.0
      %512 = vmatpush.msra.mxu0 0.0
      %513 = vmatpush.msra.mxu0 0.0
      %514 = vmatpush.msra.mxu0 %v384
      %515 = vmatpush.msra.mxu0 %v381
      %516 = vmatpush.msra.mxu0 %v378
      %517 = vmatpush.msra.mxu0 %v375
      %518 = vmatmul.f32.gmra.mxu0 %v388
      %v519 = vpop.f32.mrf.mxu0
      %v520 = vadd.f32 %v491, %v519
      %521 = vmatmul.f32.gmra.mxu0 %v391
      %v522 = vpop.f32.mrf.mxu0
      %v523 = vadd.f32 %v494, %v522
      %524 = vmatmul.f32.gmra.mxu0 %v394
      %v525 = vpop.f32.mrf.mxu0
      %v526 = vadd.f32 %v497, %v525
      %527 = vmatmul.f32.gmra.mxu0 %v397
      %v528 = vpop.f32.mrf.mxu0
      %v529 = vadd.f32 %v500, %v528
      %530 = vdwg.mxu0
      %v531 = vmul.f32 %v469, %v469
      %v532 = vmul.f32 %v470, %v470
      %v533 = vmul.f32 %v471, %v471
      %v534 = vmul.f32 %v472, %v472
      %v535 = vmul.f32 %v520, %v520
      %v536 = vmul.f32 %v523, %v523
      %v537 = vmul.f32 %v526, %v526
      %v538 = vmul.f32 %v529, %v529
      %v539 = vadd.f32 %v531, %v535
      %v540 = vadd.f32 %v532, %v536
      %v541 = vadd.f32 %v533, %v537
      %v542 = vadd.f32 %v534, %v538
      %v543 = vrsqrt.pop %v539
      %v544 = vmul.f32 %v543, %v539
      %v545 = vmul.f32 %v544, %v543
      %v546 = vmul.f32 0.5, %v545
      %v547 = vsub.f32 1.5, %v546
      %v548 = vmul.f32 %v543, %v547
      %v549 = vmul.f32 %v539, %v548
      %vm550 = vcmp.eq.f32.partialorder %v539, inf
      %v551 = vsel %vm550, %v539, %v549
      %vm552 = vcmp.eq.f32.partialorder %v539, 0.0
      %v553 = vand.u32 %v539, 2147483648
      %v554 = vsel %vm552, %v553, %v551
      %v555 = vrsqrt.pop %v540
      %v556 = vmul.f32 %v555, %v540
      %v557 = vmul.f32 %v556, %v555
      %v558 = vmul.f32 0.5, %v557
      %v559 = vsub.f32 1.5, %v558
      %v560 = vmul.f32 %v555, %v559
      %v561 = vmul.f32 %v540, %v560
      %vm562 = vcmp.eq.f32.partialorder %v540, inf
      %v563 = vsel %vm562, %v540, %v561
      %vm564 = vcmp.eq.f32.partialorder %v540, 0.0
      %v565 = vand.u32 %v540, 2147483648
      %v566 = vsel %vm564, %v565, %v563
      %v567 = vrsqrt.pop %v541
      %v568 = vmul.f32 %v567, %v541
      %v569 = vmul.f32 %v568, %v567
      %v570 = vmul.f32 0.5, %v569
      %v571 = vsub.f32 1.5, %v570
      %v572 = vmul.f32 %v567, %v571
      %v573 = vmul.f32 %v541, %v572
      %vm574 = vcmp.eq.f32.partialorder %v541, inf
      %v575 = vsel %vm574, %v541, %v573
      %vm576 = vcmp.eq.f32.partialorder %v541, 0.0
      %v577 = vand.u32 %v541, 2147483648
      %v578 = vsel %vm576, %v577, %v575
      %v579 = vrsqrt.pop %v542
      %v580 = vmul.f32 %v579, %v542
      %v581 = vmul.f32 %v580, %v579
      %v582 = vmul.f32 0.5, %v581
      %v583 = vsub.f32 1.5, %v582
      %v584 = vmul.f32 %v579, %v583
      %v585 = vmul.f32 %v542, %v584
      %vm586 = vcmp.eq.f32.partialorder %v542, inf
      %v587 = vsel %vm586, %v542, %v585
      %vm588 = vcmp.eq.f32.partialorder %v542, 0.0
      %v589 = vand.u32 %v542, 2147483648
      %v590 = vsel %vm588, %v589, %v587
      %v591 = vand.u32 2147483647, %v469
      %v592 = vand.u32 2147483647, %v520
      %v593 = vmin.f32 %v591, %v592
      %v594 = vmax.f32 %v591, %v592
      %v595 = vrcp.pop %v594
      %v596 = vmul.f32 %v594, %v595
      %v597 = vsub.f32 1.0, %v596
      %v598 = vmul.f32 %v595, %v597
      %v599 = vadd.f32 %v595, %v598
      %vm600 = vweird.f32 %v594
      %vm601 = vweird.f32 %v595
      %vm602 = vmor %vm600, %vm601
      %v603 = vsel %vm602, %v595, %v599
      %v604 = vand.u32 2147483647, %v594
      %vm605 = vcmp.eq.f32.partialorder %v604, 8.507059e+37
      %v606 = vand.u32 %v594, 2147483648
      %v607 = vor.u32 1.1754944e-38, %v606
      %v608 = vsel %vm605, %v607, %v603
      %v609 = vmul.f32 %v593, %v608
      %v610 = vmul.f32 %v609, %v609
      %v611 = vmul.f32 0.002785687, %v610
      %v612 = vadd.f32 %v611, -0.015866
      %v613 = vmul.f32 %v612, %v610
      %v614 = vadd.f32 %v613, 0.04247222
      %v615 = vmul.f32 %v614, %v610
      %v616 = vadd.f32 %v615, -0.074975304
      %v617 = vmul.f32 %v616, %v610
      %v618 = vadd.f32 %v617, 0.1064488
      %v619 = vmul.f32 %v618, %v610
      %v620 = vadd.f32 %v619, -0.14207031
      %v621 = vmul.f32 %v620, %v610
      %v622 = vadd.f32 %v621, 0.19993454
      %v623 = vmul.f32 %v622, %v610
      %v624 = vadd.f32 %v623, -0.33333147
      %v625 = vmul.f32 %v624, %v610
      %v626 = vmul.f32 %v625, %v609
      %v627 = vadd.f32 %v626, %v609
      %vm628 = vcmp.gt.f32.partialorder %v592, %v591
      %v629 = vsub.f32 1.5707964, %v627
      %v630 = vsel %vm628, %v629, %v627
      %vm631 = vcmp.lt.f32.partialorder %v469, 0.0
      %v632 = vsub.f32 3.1415927, %v630
      %v633 = vsel %vm631, %v632, %v630
      %vm634 = vcmp.lt.s32.totalorder %v469, 0
      %v635 = vsel %vm634, 3.1415927, 0.0
      %vm636 = vcmp.eq.f32.partialorder %v520, 0.0
      %v637 = vsel %vm636, %v635, %v633
      %vm638 = vcmp.ne.f32.partialorder %v469, %v469
      %vm639 = vcmp.ne.f32.partialorder %v520, %v520
      %vm640 = vmor %vm638, %vm639
      %v641 = vsel %vm640, nan, %v637
      %vm642 = vcmp.lt.f32.partialorder %v469, 0.0
      %v643 = vsel %vm642, 2.3561945, 0.7853982
      %vm644 = vcmp.eq.s32.totalorder %v591, inf
      %vm645 = vcmp.eq.s32.totalorder %v592, inf
      %vm646 = vmand %vm644, %vm645
      %v647 = vsel %vm646, %v643, %v641
      %v648 = vand.u32 2147483647, %v647
      %v649 = vand.u32 %v520, 2147483648
      %v650 = vor.u32 %v648, %v649
      %v651 = vand.u32 2147483647, %v470
      %v652 = vand.u32 2147483647, %v523
      %v653 = vmin.f32 %v651, %v652
      %v654 = vmax.f32 %v651, %v652
      %v655 = vrcp.pop %v654
      %v656 = vmul.f32 %v654, %v655
      %v657 = vsub.f32 1.0, %v656
      %v658 = vmul.f32 %v655, %v657
      %v659 = vadd.f32 %v655, %v658
      %vm660 = vweird.f32 %v654
      %vm661 = vweird.f32 %v655
      %vm662 = vmor %vm660, %vm661
      %v663 = vsel %vm662, %v655, %v659
      %v664 = vand.u32 2147483647, %v654
      %vm665 = vcmp.eq.f32.partialorder %v664, 8.507059e+37
      %v666 = vand.u32 %v654, 2147483648
      %v667 = vor.u32 1.1754944e-38, %v666
      %v668 = vsel %vm665, %v667, %v663
      %v669 = vmul.f32 %v653, %v668
      %v670 = vmul.f32 %v669, %v669
      %v671 = vmul.f32 0.002785687, %v670
      %v672 = vadd.f32 %v671, -0.015866
      %v673 = vmul.f32 %v672, %v670
      %v674 = vadd.f32 %v673, 0.04247222
      %v675 = vmul.f32 %v674, %v670
      %v676 = vadd.f32 %v675, -0.074975304
      %v677 = vmul.f32 %v676, %v670
      %v678 = vadd.f32 %v677, 0.1064488
      %v679 = vmul.f32 %v678, %v670
      %v680 = vadd.f32 %v679, -0.14207031
      %v681 = vmul.f32 %v680, %v670
      %v682 = vadd.f32 %v681, 0.19993454
      %v683 = vmul.f32 %v682, %v670
      %v684 = vadd.f32 %v683, -0.33333147
      %v685 = vmul.f32 %v684, %v670
      %v686 = vmul.f32 %v685, %v669
      %v687 = vadd.f32 %v686, %v669
      %vm688 = vcmp.gt.f32.partialorder %v652, %v651
      %v689 = vsub.f32 1.5707964, %v687
      %v690 = vsel %vm688, %v689, %v687
      %vm691 = vcmp.lt.f32.partialorder %v470, 0.0
      %v692 = vsub.f32 3.1415927, %v690
      %v693 = vsel %vm691, %v692, %v690
      %vm694 = vcmp.lt.s32.totalorder %v470, 0
      %v695 = vsel %vm694, 3.1415927, 0.0
      %vm696 = vcmp.eq.f32.partialorder %v523, 0.0
      %v697 = vsel %vm696, %v695, %v693
      %vm698 = vcmp.ne.f32.partialorder %v470, %v470
      %vm699 = vcmp.ne.f32.partialorder %v523, %v523
      %vm700 = vmor %vm698, %vm699
      %v701 = vsel %vm700, nan, %v697
      %vm702 = vcmp.lt.f32.partialorder %v470, 0.0
      %v703 = vsel %vm702, 2.3561945, 0.7853982
      %vm704 = vcmp.eq.s32.totalorder %v651, inf
      %vm705 = vcmp.eq.s32.totalorder %v652, inf
      %vm706 = vmand %vm704, %vm705
      %v707 = vsel %vm706, %v703, %v701
      %v708 = vand.u32 2147483647, %v707
      %v709 = vand.u32 %v523, 2147483648
      %v710 = vor.u32 %v708, %v709
      %v711 = vand.u32 2147483647, %v471
      %v712 = vand.u32 2147483647, %v526
      %v713 = vmin.f32 %v711, %v712
      %v714 = vmax.f32 %v711, %v712
      %v715 = vrcp.pop %v714
      %v716 = vmul.f32 %v714, %v715
      %v717 = vsub.f32 1.0, %v716
      %v718 = vmul.f32 %v715, %v717
      %v719 = vadd.f32 %v715, %v718
      %vm720 = vweird.f32 %v714
      %vm721 = vweird.f32 %v715
      %vm722 = vmor %vm720, %vm721
      %v723 = vsel %vm722, %v715, %v719
      %v724 = vand.u32 2147483647, %v714
      %vm725 = vcmp.eq.f32.partialorder %v724, 8.507059e+37
      %v726 = vand.u32 %v714, 2147483648
      %v727 = vor.u32 1.1754944e-38, %v726
      %v728 = vsel %vm725, %v727, %v723
      %v729 = vmul.f32 %v713, %v728
      %v730 = vmul.f32 %v729, %v729
      %v731 = vmul.f32 0.002785687, %v730
      %v732 = vadd.f32 %v731, -0.015866
      %v733 = vmul.f32 %v732, %v730
      %v734 = vadd.f32 %v733, 0.04247222
      %v735 = vmul.f32 %v734, %v730
      %v736 = vadd.f32 %v735, -0.074975304
      %v737 = vmul.f32 %v736, %v730
      %v738 = vadd.f32 %v737, 0.1064488
      %v739 = vmul.f32 %v738, %v730
      %v740 = vadd.f32 %v739, -0.14207031
      %v741 = vmul.f32 %v740, %v730
      %v742 = vadd.f32 %v741, 0.19993454
      %v743 = vmul.f32 %v742, %v730
      %v744 = vadd.f32 %v743, -0.33333147
      %v745 = vmul.f32 %v744, %v730
      %v746 = vmul.f32 %v745, %v729
      %v747 = vadd.f32 %v746, %v729
      %vm748 = vcmp.gt.f32.partialorder %v712, %v711
      %v749 = vsub.f32 1.5707964, %v747
      %v750 = vsel %vm748, %v749, %v747
      %vm751 = vcmp.lt.f32.partialorder %v471, 0.0
      %v752 = vsub.f32 3.1415927, %v750
      %v753 = vsel %vm751, %v752, %v750
      %vm754 = vcmp.lt.s32.totalorder %v471, 0
      %v755 = vsel %vm754, 3.1415927, 0.0
      %vm756 = vcmp.eq.f32.partialorder %v526, 0.0
      %v757 = vsel %vm756, %v755, %v753
      %vm758 = vcmp.ne.f32.partialorder %v471, %v471
      %vm759 = vcmp.ne.f32.partialorder %v526, %v526
      %vm760 = vmor %vm758, %vm759
      %v761 = vsel %vm760, nan, %v757
      %vm762 = vcmp.lt.f32.partialorder %v471, 0.0
      %v763 = vsel %vm762, 2.3561945, 0.7853982
      %vm764 = vcmp.eq.s32.totalorder %v711, inf
      %vm765 = vcmp.eq.s32.totalorder %v712, inf
      %vm766 = vmand %vm764, %vm765
      %v767 = vsel %vm766, %v763, %v761
      %v768 = vand.u32 2147483647, %v767
      %v769 = vand.u32 %v526, 2147483648
      %v770 = vor.u32 %v768, %v769
      %v771 = vand.u32 2147483647, %v472
      %v772 = vand.u32 2147483647, %v529
      %v773 = vmin.f32 %v771, %v772
      %v774 = vmax.f32 %v771, %v772
      %v775 = vrcp.pop %v774
      %v776 = vmul.f32 %v774, %v775
      %v777 = vsub.f32 1.0, %v776
      %v778 = vmul.f32 %v775, %v777
      %v779 = vadd.f32 %v775, %v778
      %vm780 = vweird.f32 %v774
      %vm781 = vweird.f32 %v775
      %vm782 = vmor %vm780, %vm781
      %v783 = vsel %vm782, %v775, %v779
      %v784 = vand.u32 2147483647, %v774
      %vm785 = vcmp.eq.f32.partialorder %v784, 8.507059e+37
      %v786 = vand.u32 %v774, 2147483648
      %v787 = vor.u32 1.1754944e-38, %v786
      %v788 = vsel %vm785, %v787, %v783
      %v789 = vmul.f32 %v773, %v788
      %v790 = vmul.f32 %v789, %v789
      %v791 = vmul.f32 0.002785687, %v790
      %v792 = vadd.f32 %v791, -0.015866
      %v793 = vmul.f32 %v792, %v790
      %v794 = vadd.f32 %v793, 0.04247222
      %v795 = vmul.f32 %v794, %v790
      %v796 = vadd.f32 %v795, -0.074975304
      %v797 = vmul.f32 %v796, %v790
      %v798 = vadd.f32 %v797, 0.1064488
      %v799 = vmul.f32 %v798, %v790
      %v800 = vadd.f32 %v799, -0.14207031
      %v801 = vmul.f32 %v800, %v790
      %v802 = vadd.f32 %v801, 0.19993454
      %v803 = vmul.f32 %v802, %v790
      %v804 = vadd.f32 %v803, -0.33333147
      %v805 = vmul.f32 %v804, %v790
      %v806 = vmul.f32 %v805, %v789
      %v807 = vadd.f32 %v806, %v789
      %vm808 = vcmp.gt.f32.partialorder %v772, %v771
      %v809 = vsub.f32 1.5707964, %v807
      %v810 = vsel %vm808, %v809, %v807
      %vm811 = vcmp.lt.f32.partialorder %v472, 0.0
      %v812 = vsub.f32 3.1415927, %v810
      %v813 = vsel %vm811, %v812, %v810
      %vm814 = vcmp.lt.s32.totalorder %v472, 0
      %v815 = vsel %vm814, 3.1415927, 0.0
      %vm816 = vcmp.eq.f32.partialorder %v529, 0.0
      %v817 = vsel %vm816, %v815, %v813
      %vm818 = vcmp.ne.f32.partialorder %v472, %v472
      %vm819 = vcmp.ne.f32.partialorder %v529, %v529
      %vm820 = vmor %vm818, %vm819
      %v821 = vsel %vm820, nan, %v817
      %vm822 = vcmp.lt.f32.partialorder %v472, 0.0
      %v823 = vsel %vm822, 2.3561945, 0.7853982
      %vm824 = vcmp.eq.s32.totalorder %v771, inf
      %vm825 = vcmp.eq.s32.totalorder %v772, inf
      %vm826 = vmand %vm824, %vm825
      %v827 = vsel %vm826, %v823, %v821
      %v828 = vand.u32 2147483647, %v827
      %v829 = vand.u32 %v529, 2147483648
      %v830 = vor.u32 %v828, %v829
      %v831 = vld [vmem:[#allocation2] sm:$0xff]
      %v832 = vld [vmem:[#allocation2 + $0x8] sm:$0xff]
      %v833 = vsub.f32 %v554, %v578
      %v834 = vsub.f32 %v566, %v590
      %v835 = vand.u32 2147483647, %v833
      %v836 = vand.u32 2147483647, %v834
      %v837 = vadd.f32 %v831, %v835
      %v838 = vadd.f32 %v832, %v836
      %839 = vst.msk [vmem:[#allocation2] sm:$0xff] %vm315, %v837
      %840 = vst.msk [vmem:[#allocation2 + $0x8] sm:$0xff] %vm315, %v838
      %v841 = vld [vmem:[#allocation3] sm:$0xff]
      %v842 = vld [vmem:[#allocation3 + $0x8] sm:$0xff]
      %v843 = vsub.f32 %v650, %v770
      %v844 = vsub.f32 %v710, %v830
      %v845 = vand.u32 2147483647, %v843
      %v846 = vand.u32 2147483647, %v844
      %v847 = vadd.f32 %v841, %v845
      %v848 = vadd.f32 %v842, %v846
      %849 = vst.msk [vmem:[#allocation3] sm:$0xff] %vm315, %v847
      %850 = vst.msk [vmem:[#allocation3 + $0x8] sm:$0xff] %vm315, %v848
      // Predicated region
      $region45: #{hiera_perceptual_loss_no_mse.5} parent=39 // pred_check
        %p851 = pneg %p278
      $region46: #{hiera_perceptual_loss_no_mse.5} parent=39 // pred_check_branch
        %853 = sbr.rel (%p851) target = $region48
      $region47: #{hiera_perceptual_loss_no_mse.5} parent=39 // pred_region
        %v854 = vld [vmem:[#allocation2] sm:$0xff]
        %v855 = vld [vmem:[#allocation2 + $0x8] sm:$0xff]
        %v856 = vsel %vm315, %v854, 0.0
        %v857 = vsel %vm315, %v855, 0.0
        %v858 = vadd.f32 %v856, %v857
        %859 = vadd.xlane.f32.xlu0 %v858
        %v860 = vpop.xlane.xlu0 %859
        %v861 = vrot.slane %v860, 4
        %v862 = vadd.f32 %v860, %v861
        %v863 = vrot.slane %v862, 2
        %v864 = vadd.f32 %v862, %v863
        %v865 = vrot.slane %v864, 1
        %v866 = vadd.f32 %v864, %v865
        %s867 = vtos %v866
        %v868 = vstv %s867
        %vm869 = vcmask 0
        %870 = vst.msk [vmem:[%s274] sm:$0x1] %vm869, %v868
        %v871 = vld [vmem:[#allocation3] sm:$0xff]
        %v872 = vld [vmem:[#allocation3 + $0x8] sm:$0xff]
        %v873 = vsel %vm315, %v871, 0.0
        %v874 = vsel %vm315, %v872, 0.0
        %v875 = vadd.f32 %v873, %v874
        %876 = vadd.xlane.f32.xlu0 %v875
        %v877 = vpop.xlane.xlu0 %876
        %v878 = vrot.slane %v877, 4
        %v879 = vadd.f32 %v877, %v878
        %v880 = vrot.slane %v879, 2
        %v881 = vadd.f32 %v879, %v880
        %v882 = vrot.slane %v881, 1
        %v883 = vadd.f32 %v881, %v882
        %s884 = vtos %v883
        %v885 = vstv %s884
        %886 = vst.msk [vmem:[%s277] sm:$0x1] %vm869, %v885
      $region48: #{hiera_perceptual_loss_no_mse.5} parent=39 // pred_fallthru
        _
      %p887 = scmp.lt.s32.totalorder %s22, 1
      %s888 = scalar_select %p887, %s22, 1
      %s889 = scalar_lea.vmem %s5, %s888
      %p890 = scmp.lt.s32.totalorder %s22, 1
      %s891 = scalar_select %p890, %s22, 1
      %s892 = scalar_lea.vmem %s6, %s891
      // Predicated region
      $region49: #{hiera_perceptual_loss_no_mse.5} parent=39 // pred_check
        %p893 = pneg %p160
      $region50: #{hiera_perceptual_loss_no_mse.5} parent=39 // pred_check_branch
        %895 = sbr.rel (%p893) target = $region52
      $region51: #{hiera_perceptual_loss_no_mse.5} parent=39 // pred_region
        _
      $region52: #{hiera_perceptual_loss_no_mse.5} parent=39 // pred_fallthru
        _
      // Predicated region
      $region53: #{hiera_perceptual_loss_no_mse.5} parent=39 // pred_check
        %p896 = pneg %p186
      $region54: #{hiera_perceptual_loss_no_mse.5} parent=39 // pred_check_branch
        %898 = sbr.rel (%p896) target = $region56
      $region55: #{hiera_perceptual_loss_no_mse.5} parent=39 // pred_region
        _
      $region56: #{hiera_perceptual_loss_no_mse.5} parent=39 // pred_fallthru
        _
    $region40: #{hiera_perceptual_loss_no_mse.5} parent=5 // pred_fallthru
      _
    %p899 = scmp.le.s32.totalorder 2, %s13
    // Predicated region
    $region57: #{hiera_perceptual_loss_no_mse.5} parent=5 // pred_check
      %p900 = pneg %p899
    $region58: #{hiera_perceptual_loss_no_mse.5} parent=5 // pred_check_branch
      %902 = sbr.rel (%p900) target = $region60
    $region59: #{hiera_perceptual_loss_no_mse.5} parent=5 // pred_region
      %s903 = ssub.s32 %s13, 2
      // Predicated region
      $region61: #{hiera_perceptual_loss_no_mse.5} parent=59 // pred_check
        %p904 = pneg %p166
      $region62: #{hiera_perceptual_loss_no_mse.5} parent=59 // pred_check_branch
        %906 = sbr.rel (%p904) target = $region64
      $region63: #{hiera_perceptual_loss_no_mse.5} parent=59 // pred_region
        %p907 = scmp.lt.s32.totalorder %s24, 1
        %s908 = scalar_select %p907, %s24, 1
        %s909 = scalar_lea.vmem %s5, %s908
      $region64: #{hiera_perceptual_loss_no_mse.5} parent=59 // pred_fallthru
        _
      // Predicated region
      $region65: #{hiera_perceptual_loss_no_mse.5} parent=59 // pred_check
        %p910 = pneg %p192
      $region66: #{hiera_perceptual_loss_no_mse.5} parent=59 // pred_check_branch
        %912 = sbr.rel (%p910) target = $region68
      $region67: #{hiera_perceptual_loss_no_mse.5} parent=59 // pred_region
        %p913 = scmp.lt.s32.totalorder %s24, 1
        %s914 = scalar_select %p913, %s24, 1
        %s915 = scalar_lea.vmem %s6, %s914
      $region68: #{hiera_perceptual_loss_no_mse.5} parent=59 // pred_fallthru
        _
    $region60: #{hiera_perceptual_loss_no_mse.5} parent=5 // pred_fallthru
      _
  $region6: #{hiera_perceptual_loss_no_mse.5} parent=0 // loop_footer
    %s17 = sadd.s32 1, %s13
  $region7: #{hiera_perceptual_loss_no_mse.5} parent=0 // loop_footer_branch
    %12 = sbr.rel target = $region3
  $region8: #{hiera_perceptual_loss_no_mse.5} parent=0 // loop_exit
    _

</llo_original>
